<compile_context>
chip_gen: v7x
topology: tpu7x:2x2x1
jax: 0.10.0
libtpu: 0.0.40
codegen_flags: <defaults>
</compile_context>

<pallas_src>
import functools

import jax
import jax.numpy as jnp
from jax.experimental import pallas as pl
from jax.experimental.pallas import tpu as pltpu


def _grud_kernel(seq_ref, w_ref, b_ref, out_ref, *, T, BP, D, H):
    f32 = jnp.float32

    x = seq_ref[0]     # (T*BP, D)
    xl = seq_ref[1]    # (T*BP, D)
    m = seq_ref[2]     # (T*BP, D)
    dl = seq_ref[3]    # (T*BP, D)
    xm = seq_ref[4]    # (T*BP, D)

    # ---- unpack packed weight / bias slabs (all slices lane/sublane aligned) ----
    wxm = w_ref[:, 0:3 * H]              # (2D, 3H)  [wx_all ; wm_all]
    wgh = w_ref[0:D, 128:128 + H]        # (D, H)    gamma_h weight^T
    whh = w_ref[D:2 * D, 128:128 + H]    # (H, H)    h-part of hl
    whzr = w_ref[0:H, 256:256 + 2 * H]   # (H, 2H)   [Wzh | Wrh]

    gx_b = b_ref[0:1, 0:D]               # (1, D)
    gh_b = b_ref[1:2, 0:D]               # (1, D)
    gx_diag = b_ref[2:3, 0:D]            # (1, D)  diagonal of gamma_x weight
    b_all = b_ref[3:4, 0:3 * H]          # (1, 3H) [zl_b | rl_b | hl_b]

    # ---- batched, h-independent precompute ----
    # gamma_x: FilterLinear is diagonal -> pure VPU elementwise (no MXU push).
    delta_x = jnp.exp(-jnp.maximum(dl * gx_diag + gx_b, 0.0))
    # gamma_h: one MXU push over all timesteps.
    delta_h = jnp.exp(-jnp.maximum(
        jnp.dot(dl, wgh, preferred_element_type=f32) + gh_b, 0.0))   # (T*BP, H)

    # impute x for every timestep at once.
    x_imp = m * x + (1.0 - m) * (delta_x * xl + (1.0 - delta_x) * xm)

    # fused x/m contributions to z, r, h_tilde: single (T*BP, 2D)@(2D, 3H) push.
    p = (jnp.dot(jnp.concatenate([x_imp, m], axis=1), wxm,
                 preferred_element_type=f32) + b_all)                # (T*BP, 3H)

    # ---- sequential recurrence, fully unrolled (T is small & static) ----
    # TODO(synk): optionally hold whzr/whh in MXU staging registers via
    # pltpu.matmul_push_rhs / matmul_acc_lhs / matmul_pop across the unrolled
    # loop (same RHS reused T times); adopt only after a bundle-dump check.
    h = jnp.zeros((BP, H), f32)                    # initHidden: zeros
    h_steps = []
    for t in range(T):
        r0 = t * BP                                # sublane-aligned (BP == 8)
        dh_t = delta_h[r0:r0 + BP, :]              # (BP, H)
        pzr_t = p[r0:r0 + BP, :2 * H]              # (BP, 2H)
        ph_t = p[r0:r0 + BP, 2 * H:]               # (BP, H)

        h = dh_t * h
        zr = jax.nn.sigmoid(
            pzr_t + jnp.dot(h, whzr, preferred_element_type=f32))
        z = zr[:, :H]
        r = zr[:, H:]
        h_tilde = jnp.tanh(
            ph_t + jnp.dot(r * h, whh, preferred_element_type=f32))
        h = (1.0 - z) * h + z * h_tilde
        h_steps.append(h)

    # single lane-dense store: (BP, T*H); T*H = 256 is a multiple of 128.
    out_ref[...] = jnp.concatenate(h_steps, axis=1).astype(out_ref.dtype)


@functools.partial(jax.jit, static_argnames=("hidden_size", "output_last"))
def grud_forward(inp, x_mean, params, hidden_size, output_last=False):
    """inp: (B, 4, T, D) float32; x_mean: (B, T, D) float32."""
    B, C, T, D = inp.shape
    H = hidden_size
    assert C == 4 and D == H

    BP = 8                      # pad batch to the 8-sublane granule
    assert B <= BP

    # Pack the 5 per-timestep channels time-major, pad batch with zero rows
    # (keeps the padded sublanes numerically clean): (5, T*BP, D).
    chans = jnp.concatenate([inp, x_mean[:, None]], axis=1)        # (B, 5, T, D)
    seq = jnp.transpose(chans, (1, 2, 0, 3))                       # (5, T, B, D)
    seq = jnp.pad(seq, ((0, 0), (0, 0), (0, BP - B), (0, 0)))      # (5, T, BP, D)
    seq = seq.reshape(5, T * BP, D)

    # ---- one-time weight fusion into a single 128-lane-aligned slab ----
    def split(w):                       # (H, D+H+D) -> x / h / m blocks of W^T
        wt = w.T
        return wt[:D], wt[D:D + H], wt[D + H:]

    wzx, wzh, wzm = split(params["zl_w"])
    wrx, wrh, wrm = split(params["rl_w"])
    whx, whh, whm = split(params["hl_w"])

    wx_all = jnp.concatenate([wzx, wrx, whx], axis=1)              # (D, 3H)
    wm_all = jnp.concatenate([wzm, wrm, whm], axis=1)              # (D, 3H)
    wxm = jnp.concatenate([wx_all, wm_all], axis=0)                # (2D, 3H)
    wh_zr = jnp.concatenate([wzh, wrh], axis=1)                    # (H, 2H)

    wslab = jnp.zeros((2 * D, 3 * 128), jnp.float32)
    wslab = wslab.at[:, 0:3 * H].set(wxm)
    wslab = wslab.at[0:D, 128:128 + H].set(params["gamma_h_w"].T)
    wslab = wslab.at[D:2 * D, 128:128 + H].set(whh)
    wslab = wslab.at[0:H, 256:256 + 2 * H].set(wh_zr)

    bslab = jnp.zeros((8, 128), jnp.float32)
    bslab = bslab.at[0, 0:D].set(params["gamma_x_b"])
    bslab = bslab.at[1, 0:D].set(params["gamma_h_b"])
    bslab = bslab.at[2, 0:D].set(jnp.diagonal(params["gamma_x_w"]))
    bslab = bslab.at[3, 0:3 * H].set(
        jnp.concatenate([params["zl_b"], params["rl_b"], params["hl_b"]]))

    vmem = functools.partial(pl.BlockSpec,
                             memory_space=pltpu.MemorySpace.VMEM)
    kernel = functools.partial(_grud_kernel, T=T, BP=BP, D=D, H=H)

    out_pad = pl.pallas_call(
        kernel,
        out_shape=jax.ShapeDtypeStruct((BP, T * H), jnp.float32),
        in_specs=[vmem()] * 3,
        out_specs=vmem(),
    )(seq, wslab, bslab)

    # TODO(synk): with a larger real batch, expose B as a leading "parallel"
    # grid axis (v7x has 2 TCs) and re-derive per-block VMEM against 64 MiB.
    outputs = out_pad[:B].reshape(B, T, H)                         # (B, T, H)
    if output_last:
        return outputs[:, -1, :]
    return outputs


def grud_reference(inp, x_mean, params, hidden_size):
    """Pure-JAX reference mirroring the PyTorch forward."""
    B, _, T, D = inp.shape
    H = hidden_size
    h = jnp.zeros((B, H), jnp.float32)
    wgx = jnp.eye(D, dtype=jnp.float32) * params["gamma_x_w"]
    outs = []
    for t in range(T):
        x, xl, m, dl = inp[:, 0, t], inp[:, 1, t], inp[:, 2, t], inp[:, 3, t]
        xm = x_mean[:, t]
        dx = jnp.exp(-jnp.maximum(0.0, dl @ wgx.T + params["gamma_x_b"]))
        dh = jnp.exp(-jnp.maximum(0.0, dl @ params["gamma_h_w"].T
                                   + params["gamma_h_b"]))
        x = m * x + (1 - m) * (dx * xl + (1 - dx) * xm)
        h = dh * h
        comb = jnp.concatenate([x, h, m], axis=1)
        z = jax.nn.sigmoid(comb @ params["zl_w"].T + params["zl_b"])
        r = jax.nn.sigmoid(comb @ params["rl_w"].T + params["rl_b"])
        comb_r = jnp.concatenate([x, r * h, m], axis=1)
        h_tilde = jnp.tanh(comb_r @ params["hl_w"].T + params["hl_b"])
        h = (1 - z) * h + z * h_tilde
        outs.append(h)
    return jnp.stack(outs, axis=1)


def init_params(key, input_size, hidden_size):
    """Deterministic init mimicking torch's uniform(-stdv, stdv) scheme."""
    D, H = input_size, hidden_size
    comb = D + H + D
    ks = jax.random.split(key, 10)

    def u(k, shape, fan_in):
        s = 1.0 / jnp.sqrt(jnp.float32(fan_in))
        return jax.random.uniform(k, shape, jnp.float32, -s, s)

    return {
        "zl_w": u(ks[0], (H, comb), comb), "zl_b": u(ks[1], (H,), comb),
        "rl_w": u(ks[2], (H, comb), comb), "rl_b": u(ks[3], (H,), comb),
        "hl_w": u(ks[4], (H, comb), comb), "hl_b": u(ks[5], (H,), comb),
        "gamma_x_w": u(ks[6], (D, D), D), "gamma_x_b": u(ks[7], (D,), D),
        "gamma_h_w": u(ks[8], (D, D), D), "gamma_h_b": u(ks[9], (D,), D),
    }


if __name__ == "__main__":
    B, T = 2, 8
    D = H = 32  # module requires input_size == hidden_size (see NOTE above)

    key = jax.random.PRNGKey(0)
    kx, kxl, km, kdl, kxm, kp = jax.random.split(key, 6)

    X = jax.random.normal(kx, (B, T, D), jnp.float32)
    X_last = jax.random.normal(kxl, (B, T, D), jnp.float32)
    Mask = (jax.random.uniform(km, (B, T, D)) > 0.5).astype(jnp.float32)
    Delta = jax.random.uniform(kdl, (B, T, D), jnp.float32) * 2.0
    inp = jnp.stack([X, X_last, Mask, Delta], axis=1)       # (B, 4, T, D)
    X_mean = jax.random.normal(kxm, (B, T, D), jnp.float32) * 0.1

    params = init_params(kp, D, H)

    out = grud_forward(inp, X_mean, params, hidden_size=H, output_last=False)
    out = jax.block_until_ready(out)

    ref = grud_reference(inp, X_mean, params, H)
    assert out.shape == (B, T, H)
    assert jnp.allclose(out, ref, atol=1e-4, rtol=1e-4), (
        float(jnp.max(jnp.abs(out - ref))))

    print("KERNEL_OK")
</pallas_src>

<mosaic_0001>
module attributes {stable_mosaic.version = 11 : i64} {
  func.func @_grud_kernel(%arg0: memref<5x64x32xf32, #tpu.memory_space<vmem>>, %arg1: memref<64x384xf32, #tpu.memory_space<vmem>>, %arg2: memref<8x128xf32, #tpu.memory_space<vmem>>, %arg3: memref<8x256xf32, #tpu.memory_space<vmem>>) attributes {dimension_semantics = [], scalar_prefetch = 0 : i64, scratch_operands = 0 : i64, tpu.core_type = #tpu.core_type<tc>} {
    %c0 = arith.constant 0 : index
    %c0_0 = arith.constant 0 : index
    %c0_1 = arith.constant 0 : index
    %0 = vector.load %arg0[%c0, %c0_0, %c0_1] : memref<5x64x32xf32, #tpu.memory_space<vmem>>, vector<1x64x32xf32>
    %1 = vector.shape_cast %0 : vector<1x64x32xf32> to vector<64x32xf32>
    %c1 = arith.constant 1 : index
    %c0_2 = arith.constant 0 : index
    %c0_3 = arith.constant 0 : index
    %2 = vector.load %arg0[%c1, %c0_2, %c0_3] : memref<5x64x32xf32, #tpu.memory_space<vmem>>, vector<1x64x32xf32>
    %3 = vector.shape_cast %2 : vector<1x64x32xf32> to vector<64x32xf32>
    %c2 = arith.constant 2 : index
    %c0_4 = arith.constant 0 : index
    %c0_5 = arith.constant 0 : index
    %4 = vector.load %arg0[%c2, %c0_4, %c0_5] : memref<5x64x32xf32, #tpu.memory_space<vmem>>, vector<1x64x32xf32>
    %5 = vector.shape_cast %4 : vector<1x64x32xf32> to vector<64x32xf32>
    %c3 = arith.constant 3 : index
    %c0_6 = arith.constant 0 : index
    %c0_7 = arith.constant 0 : index
    %6 = vector.load %arg0[%c3, %c0_6, %c0_7] : memref<5x64x32xf32, #tpu.memory_space<vmem>>, vector<1x64x32xf32>
    %7 = vector.shape_cast %6 : vector<1x64x32xf32> to vector<64x32xf32>
    %c4 = arith.constant 4 : index
    %c0_8 = arith.constant 0 : index
    %c0_9 = arith.constant 0 : index
    %8 = vector.load %arg0[%c4, %c0_8, %c0_9] : memref<5x64x32xf32, #tpu.memory_space<vmem>>, vector<1x64x32xf32>
    %9 = vector.shape_cast %8 : vector<1x64x32xf32> to vector<64x32xf32>
    %c0_10 = arith.constant 0 : index
    %c0_11 = arith.constant 0 : index
    %10 = vector.load %arg1[%c0_10, %c0_11] : memref<64x384xf32, #tpu.memory_space<vmem>>, vector<64x96xf32>
    %c0_12 = arith.constant 0 : index
    %c128 = arith.constant 128 : index
    %11 = vector.load %arg1[%c0_12, %c128] : memref<64x384xf32, #tpu.memory_space<vmem>>, vector<32x32xf32>
    %c32 = arith.constant 32 : index
    %c128_13 = arith.constant 128 : index
    %12 = vector.load %arg1[%c32, %c128_13] : memref<64x384xf32, #tpu.memory_space<vmem>>, vector<32x32xf32>
    %c0_14 = arith.constant 0 : index
    %c256 = arith.constant 256 : index
    %13 = vector.load %arg1[%c0_14, %c256] : memref<64x384xf32, #tpu.memory_space<vmem>>, vector<32x64xf32>
    %c0_15 = arith.constant 0 : index
    %c0_16 = arith.constant 0 : index
    %14 = vector.load %arg2[%c0_15, %c0_16] : memref<8x128xf32, #tpu.memory_space<vmem>>, vector<1x32xf32>
    %c1_17 = arith.constant 1 : index
    %c0_18 = arith.constant 0 : index
    %15 = vector.load %arg2[%c1_17, %c0_18] : memref<8x128xf32, #tpu.memory_space<vmem>>, vector<1x32xf32>
    %c2_19 = arith.constant 2 : index
    %c0_20 = arith.constant 0 : index
    %16 = vector.load %arg2[%c2_19, %c0_20] : memref<8x128xf32, #tpu.memory_space<vmem>>, vector<1x32xf32>
    %c3_21 = arith.constant 3 : index
    %c0_22 = arith.constant 0 : index
    %17 = vector.load %arg2[%c3_21, %c0_22] : memref<8x128xf32, #tpu.memory_space<vmem>>, vector<1x96xf32>
    %18 = vector.broadcast %16 : vector<1x32xf32> to vector<64x32xf32>
    %19 = arith.mulf %7, %18 : vector<64x32xf32>
    %20 = vector.broadcast %14 : vector<1x32xf32> to vector<64x32xf32>
    %21 = arith.addf %19, %20 : vector<64x32xf32>
    %cst = arith.constant 0.000000e+00 : f32
    %22 = vector.broadcast %cst : f32 to vector<64x32xf32>
    %23 = arith.maximumf %21, %22 : vector<64x32xf32>
    %cst_23 = arith.constant 0.000000e+00 : f32
    %24 = vector.broadcast %cst_23 : f32 to vector<64x32xf32>
    %25 = arith.subf %24, %23 : vector<64x32xf32>
    %26 = math.exp %25 : vector<64x32xf32>
    %cst_24 = arith.constant dense<0.000000e+00> : vector<64x32xf32>
    %27 = tpu.matmul %7, %11, %cst_24 {dimension_numbers = #tpu.dot_dimension_numbers<[1], [0], [0], [1], [0, 0, 1, 1], [], []>} : vector<64x32xf32>, vector<32x32xf32>, vector<64x32xf32> -> vector<64x32xf32>
    %28 = vector.broadcast %15 : vector<1x32xf32> to vector<64x32xf32>
    %29 = arith.addf %27, %28 : vector<64x32xf32>
    %cst_25 = arith.constant 0.000000e+00 : f32
    %30 = vector.broadcast %cst_25 : f32 to vector<64x32xf32>
    %31 = arith.maximumf %29, %30 : vector<64x32xf32>
    %cst_26 = arith.constant 0.000000e+00 : f32
    %32 = vector.broadcast %cst_26 : f32 to vector<64x32xf32>
    %33 = arith.subf %32, %31 : vector<64x32xf32>
    %34 = math.exp %33 : vector<64x32xf32>
    %35 = arith.mulf %5, %1 : vector<64x32xf32>
    %cst_27 = arith.constant 1.000000e+00 : f32
    %36 = vector.broadcast %cst_27 : f32 to vector<64x32xf32>
    %37 = arith.subf %36, %5 : vector<64x32xf32>
    %38 = arith.mulf %26, %3 : vector<64x32xf32>
    %cst_28 = arith.constant 1.000000e+00 : f32
    %39 = vector.broadcast %cst_28 : f32 to vector<64x32xf32>
    %40 = arith.subf %39, %26 : vector<64x32xf32>
    %41 = arith.mulf %40, %9 : vector<64x32xf32>
    %42 = arith.addf %38, %41 : vector<64x32xf32>
    %43 = arith.mulf %37, %42 : vector<64x32xf32>
    %44 = arith.addf %35, %43 : vector<64x32xf32>
    %45 = tpu.concatenate %44, %5 in 1 : vector<64x32xf32>, vector<64x32xf32> -> vector<64x64xf32>
    %cst_29 = arith.constant dense<0.000000e+00> : vector<64x96xf32>
    %46 = tpu.matmul %45, %10, %cst_29 {dimension_numbers = #tpu.dot_dimension_numbers<[1], [0], [0], [1], [0, 0, 1, 1], [], []>} : vector<64x64xf32>, vector<64x96xf32>, vector<64x96xf32> -> vector<64x96xf32>
    %47 = vector.broadcast %17 : vector<1x96xf32> to vector<64x96xf32>
    %48 = arith.addf %46, %47 : vector<64x96xf32>
    %cst_30 = arith.constant 0.000000e+00 : f32
    %49 = vector.broadcast %cst_30 : f32 to vector<8x32xf32>
    %50 = vector.extract_strided_slice %34 {offsets = [0, 0], sizes = [8, 32], strides = [1, 1]} : vector<64x32xf32> to vector<8x32xf32>
    %51 = vector.extract_strided_slice %48 {offsets = [0, 0], sizes = [8, 64], strides = [1, 1]} : vector<64x96xf32> to vector<8x64xf32>
    %52 = vector.extract_strided_slice %48 {offsets = [0, 64], sizes = [8, 32], strides = [1, 1]} : vector<64x96xf32> to vector<8x32xf32>
    %53 = arith.mulf %50, %49 : vector<8x32xf32>
    %cst_31 = arith.constant dense<0.000000e+00> : vector<8x64xf32>
    %54 = tpu.matmul %53, %13, %cst_31 {dimension_numbers = #tpu.dot_dimension_numbers<[1], [0], [0], [1], [0, 0, 1, 1], [], []>} : vector<8x32xf32>, vector<32x64xf32>, vector<8x64xf32> -> vector<8x64xf32>
    %55 = arith.addf %51, %54 : vector<8x64xf32>
    %56 = arith.negf %55 : vector<8x64xf32>
    %57 = math.exp %56 : vector<8x64xf32>
    %cst_32 = arith.constant 1.000000e+00 : f32
    %58 = vector.broadcast %cst_32 : f32 to vector<8x64xf32>
    %59 = arith.addf %58, %57 : vector<8x64xf32>
    %60 = arith.divf %58, %59 : vector<8x64xf32>
    %61 = vector.extract_strided_slice %60 {offsets = [0, 0], sizes = [8, 32], strides = [1, 1]} : vector<8x64xf32> to vector<8x32xf32>
    %62 = vector.extract_strided_slice %60 {offsets = [0, 32], sizes = [8, 32], strides = [1, 1]} : vector<8x64xf32> to vector<8x32xf32>
    %63 = arith.mulf %62, %53 : vector<8x32xf32>
    %cst_33 = arith.constant dense<0.000000e+00> : vector<8x32xf32>
    %64 = tpu.matmul %63, %12, %cst_33 {dimension_numbers = #tpu.dot_dimension_numbers<[1], [0], [0], [1], [0, 0, 1, 1], [], []>} : vector<8x32xf32>, vector<32x32xf32>, vector<8x32xf32> -> vector<8x32xf32>
    %65 = arith.addf %52, %64 : vector<8x32xf32>
    %66 = math.tanh %65 : vector<8x32xf32>
    %cst_34 = arith.constant 1.000000e+00 : f32
    %67 = vector.broadcast %cst_34 : f32 to vector<8x32xf32>
    %68 = arith.subf %67, %61 : vector<8x32xf32>
    %69 = arith.mulf %68, %53 : vector<8x32xf32>
    %70 = arith.mulf %61, %66 : vector<8x32xf32>
    %71 = arith.addf %69, %70 : vector<8x32xf32>
    %72 = vector.extract_strided_slice %34 {offsets = [8, 0], sizes = [8, 32], strides = [1, 1]} : vector<64x32xf32> to vector<8x32xf32>
    %73 = vector.extract_strided_slice %48 {offsets = [8, 0], sizes = [8, 64], strides = [1, 1]} : vector<64x96xf32> to vector<8x64xf32>
    %74 = vector.extract_strided_slice %48 {offsets = [8, 64], sizes = [8, 32], strides = [1, 1]} : vector<64x96xf32> to vector<8x32xf32>
    %75 = arith.mulf %72, %71 : vector<8x32xf32>
    %cst_35 = arith.constant dense<0.000000e+00> : vector<8x64xf32>
    %76 = tpu.matmul %75, %13, %cst_35 {dimension_numbers = #tpu.dot_dimension_numbers<[1], [0], [0], [1], [0, 0, 1, 1], [], []>} : vector<8x32xf32>, vector<32x64xf32>, vector<8x64xf32> -> vector<8x64xf32>
    %77 = arith.addf %73, %76 : vector<8x64xf32>
    %78 = arith.negf %77 : vector<8x64xf32>
    %79 = math.exp %78 : vector<8x64xf32>
    %cst_36 = arith.constant 1.000000e+00 : f32
    %80 = vector.broadcast %cst_36 : f32 to vector<8x64xf32>
    %81 = arith.addf %80, %79 : vector<8x64xf32>
    %82 = arith.divf %80, %81 : vector<8x64xf32>
    %83 = vector.extract_strided_slice %82 {offsets = [0, 0], sizes = [8, 32], strides = [1, 1]} : vector<8x64xf32> to vector<8x32xf32>
    %84 = vector.extract_strided_slice %82 {offsets = [0, 32], sizes = [8, 32], strides = [1, 1]} : vector<8x64xf32> to vector<8x32xf32>
    %85 = arith.mulf %84, %75 : vector<8x32xf32>
    %cst_37 = arith.constant dense<0.000000e+00> : vector<8x32xf32>
    %86 = tpu.matmul %85, %12, %cst_37 {dimension_numbers = #tpu.dot_dimension_numbers<[1], [0], [0], [1], [0, 0, 1, 1], [], []>} : vector<8x32xf32>, vector<32x32xf32>, vector<8x32xf32> -> vector<8x32xf32>
    %87 = arith.addf %74, %86 : vector<8x32xf32>
    %88 = math.tanh %87 : vector<8x32xf32>
    %cst_38 = arith.constant 1.000000e+00 : f32
    %89 = vector.broadcast %cst_38 : f32 to vector<8x32xf32>
    %90 = arith.subf %89, %83 : vector<8x32xf32>
    %91 = arith.mulf %90, %75 : vector<8x32xf32>
    %92 = arith.mulf %83, %88 : vector<8x32xf32>
    %93 = arith.addf %91, %92 : vector<8x32xf32>
    %94 = vector.extract_strided_slice %34 {offsets = [16, 0], sizes = [8, 32], strides = [1, 1]} : vector<64x32xf32> to vector<8x32xf32>
    %95 = vector.extract_strided_slice %48 {offsets = [16, 0], sizes = [8, 64], strides = [1, 1]} : vector<64x96xf32> to vector<8x64xf32>
    %96 = vector.extract_strided_slice %48 {offsets = [16, 64], sizes = [8, 32], strides = [1, 1]} : vector<64x96xf32> to vector<8x32xf32>
    %97 = arith.mulf %94, %93 : vector<8x32xf32>
    %cst_39 = arith.constant dense<0.000000e+00> : vector<8x64xf32>
    %98 = tpu.matmul %97, %13, %cst_39 {dimension_numbers = #tpu.dot_dimension_numbers<[1], [0], [0], [1], [0, 0, 1, 1], [], []>} : vector<8x32xf32>, vector<32x64xf32>, vector<8x64xf32> -> vector<8x64xf32>
    %99 = arith.addf %95, %98 : vector<8x64xf32>
    %100 = arith.negf %99 : vector<8x64xf32>
    %101 = math.exp %100 : vector<8x64xf32>
    %cst_40 = arith.constant 1.000000e+00 : f32
    %102 = vector.broadcast %cst_40 : f32 to vector<8x64xf32>
    %103 = arith.addf %102, %101 : vector<8x64xf32>
    %104 = arith.divf %102, %103 : vector<8x64xf32>
    %105 = vector.extract_strided_slice %104 {offsets = [0, 0], sizes = [8, 32], strides = [1, 1]} : vector<8x64xf32> to vector<8x32xf32>
    %106 = vector.extract_strided_slice %104 {offsets = [0, 32], sizes = [8, 32], strides = [1, 1]} : vector<8x64xf32> to vector<8x32xf32>
    %107 = arith.mulf %106, %97 : vector<8x32xf32>
    %cst_41 = arith.constant dense<0.000000e+00> : vector<8x32xf32>
    %108 = tpu.matmul %107, %12, %cst_41 {dimension_numbers = #tpu.dot_dimension_numbers<[1], [0], [0], [1], [0, 0, 1, 1], [], []>} : vector<8x32xf32>, vector<32x32xf32>, vector<8x32xf32> -> vector<8x32xf32>
    %109 = arith.addf %96, %108 : vector<8x32xf32>
    %110 = math.tanh %109 : vector<8x32xf32>
    %cst_42 = arith.constant 1.000000e+00 : f32
    %111 = vector.broadcast %cst_42 : f32 to vector<8x32xf32>
    %112 = arith.subf %111, %105 : vector<8x32xf32>
    %113 = arith.mulf %112, %97 : vector<8x32xf32>
    %114 = arith.mulf %105, %110 : vector<8x32xf32>
    %115 = arith.addf %113, %114 : vector<8x32xf32>
    %116 = vector.extract_strided_slice %34 {offsets = [24, 0], sizes = [8, 32], strides = [1, 1]} : vector<64x32xf32> to vector<8x32xf32>
    %117 = vector.extract_strided_slice %48 {offsets = [24, 0], sizes = [8, 64], strides = [1, 1]} : vector<64x96xf32> to vector<8x64xf32>
    %118 = vector.extract_strided_slice %48 {offsets = [24, 64], sizes = [8, 32], strides = [1, 1]} : vector<64x96xf32> to vector<8x32xf32>
    %119 = arith.mulf %116, %115 : vector<8x32xf32>
    %cst_43 = arith.constant dense<0.000000e+00> : vector<8x64xf32>
    %120 = tpu.matmul %119, %13, %cst_43 {dimension_numbers = #tpu.dot_dimension_numbers<[1], [0], [0], [1], [0, 0, 1, 1], [], []>} : vector<8x32xf32>, vector<32x64xf32>, vector<8x64xf32> -> vector<8x64xf32>
    %121 = arith.addf %117, %120 : vector<8x64xf32>
    %122 = arith.negf %121 : vector<8x64xf32>
    %123 = math.exp %122 : vector<8x64xf32>
    %cst_44 = arith.constant 1.000000e+00 : f32
    %124 = vector.broadcast %cst_44 : f32 to vector<8x64xf32>
    %125 = arith.addf %124, %123 : vector<8x64xf32>
    %126 = arith.divf %124, %125 : vector<8x64xf32>
    %127 = vector.extract_strided_slice %126 {offsets = [0, 0], sizes = [8, 32], strides = [1, 1]} : vector<8x64xf32> to vector<8x32xf32>
    %128 = vector.extract_strided_slice %126 {offsets = [0, 32], sizes = [8, 32], strides = [1, 1]} : vector<8x64xf32> to vector<8x32xf32>
    %129 = arith.mulf %128, %119 : vector<8x32xf32>
    %cst_45 = arith.constant dense<0.000000e+00> : vector<8x32xf32>
    %130 = tpu.matmul %129, %12, %cst_45 {dimension_numbers = #tpu.dot_dimension_numbers<[1], [0], [0], [1], [0, 0, 1, 1], [], []>} : vector<8x32xf32>, vector<32x32xf32>, vector<8x32xf32> -> vector<8x32xf32>
    %131 = arith.addf %118, %130 : vector<8x32xf32>
    %132 = math.tanh %131 : vector<8x32xf32>
    %cst_46 = arith.constant 1.000000e+00 : f32
    %133 = vector.broadcast %cst_46 : f32 to vector<8x32xf32>
    %134 = arith.subf %133, %127 : vector<8x32xf32>
    %135 = arith.mulf %134, %119 : vector<8x32xf32>
    %136 = arith.mulf %127, %132 : vector<8x32xf32>
    %137 = arith.addf %135, %136 : vector<8x32xf32>
    %138 = vector.extract_strided_slice %34 {offsets = [32, 0], sizes = [8, 32], strides = [1, 1]} : vector<64x32xf32> to vector<8x32xf32>
    %139 = vector.extract_strided_slice %48 {offsets = [32, 0], sizes = [8, 64], strides = [1, 1]} : vector<64x96xf32> to vector<8x64xf32>
    %140 = vector.extract_strided_slice %48 {offsets = [32, 64], sizes = [8, 32], strides = [1, 1]} : vector<64x96xf32> to vector<8x32xf32>
    %141 = arith.mulf %138, %137 : vector<8x32xf32>
    %cst_47 = arith.constant dense<0.000000e+00> : vector<8x64xf32>
    %142 = tpu.matmul %141, %13, %cst_47 {dimension_numbers = #tpu.dot_dimension_numbers<[1], [0], [0], [1], [0, 0, 1, 1], [], []>} : vector<8x32xf32>, vector<32x64xf32>, vector<8x64xf32> -> vector<8x64xf32>
    %143 = arith.addf %139, %142 : vector<8x64xf32>
    %144 = arith.negf %143 : vector<8x64xf32>
    %145 = math.exp %144 : vector<8x64xf32>
    %cst_48 = arith.constant 1.000000e+00 : f32
    %146 = vector.broadcast %cst_48 : f32 to vector<8x64xf32>
    %147 = arith.addf %146, %145 : vector<8x64xf32>
    %148 = arith.divf %146, %147 : vector<8x64xf32>
    %149 = vector.extract_strided_slice %148 {offsets = [0, 0], sizes = [8, 32], strides = [1, 1]} : vector<8x64xf32> to vector<8x32xf32>
    %150 = vector.extract_strided_slice %148 {offsets = [0, 32], sizes = [8, 32], strides = [1, 1]} : vector<8x64xf32> to vector<8x32xf32>
    %151 = arith.mulf %150, %141 : vector<8x32xf32>
    %cst_49 = arith.constant dense<0.000000e+00> : vector<8x32xf32>
    %152 = tpu.matmul %151, %12, %cst_49 {dimension_numbers = #tpu.dot_dimension_numbers<[1], [0], [0], [1], [0, 0, 1, 1], [], []>} : vector<8x32xf32>, vector<32x32xf32>, vector<8x32xf32> -> vector<8x32xf32>
    %153 = arith.addf %140, %152 : vector<8x32xf32>
    %154 = math.tanh %153 : vector<8x32xf32>
    %cst_50 = arith.constant 1.000000e+00 : f32
    %155 = vector.broadcast %cst_50 : f32 to vector<8x32xf32>
    %156 = arith.subf %155, %149 : vector<8x32xf32>
    %157 = arith.mulf %156, %141 : vector<8x32xf32>
    %158 = arith.mulf %149, %154 : vector<8x32xf32>
    %159 = arith.addf %157, %158 : vector<8x32xf32>
    %160 = vector.extract_strided_slice %34 {offsets = [40, 0], sizes = [8, 32], strides = [1, 1]} : vector<64x32xf32> to vector<8x32xf32>
    %161 = vector.extract_strided_slice %48 {offsets = [40, 0], sizes = [8, 64], strides = [1, 1]} : vector<64x96xf32> to vector<8x64xf32>
    %162 = vector.extract_strided_slice %48 {offsets = [40, 64], sizes = [8, 32], strides = [1, 1]} : vector<64x96xf32> to vector<8x32xf32>
    %163 = arith.mulf %160, %159 : vector<8x32xf32>
    %cst_51 = arith.constant dense<0.000000e+00> : vector<8x64xf32>
    %164 = tpu.matmul %163, %13, %cst_51 {dimension_numbers = #tpu.dot_dimension_numbers<[1], [0], [0], [1], [0, 0, 1, 1], [], []>} : vector<8x32xf32>, vector<32x64xf32>, vector<8x64xf32> -> vector<8x64xf32>
    %165 = arith.addf %161, %164 : vector<8x64xf32>
    %166 = arith.negf %165 : vector<8x64xf32>
    %167 = math.exp %166 : vector<8x64xf32>
    %cst_52 = arith.constant 1.000000e+00 : f32
    %168 = vector.broadcast %cst_52 : f32 to vector<8x64xf32>
    %169 = arith.addf %168, %167 : vector<8x64xf32>
    %170 = arith.divf %168, %169 : vector<8x64xf32>
    %171 = vector.extract_strided_slice %170 {offsets = [0, 0], sizes = [8, 32], strides = [1, 1]} : vector<8x64xf32> to vector<8x32xf32>
    %172 = vector.extract_strided_slice %170 {offsets = [0, 32], sizes = [8, 32], strides = [1, 1]} : vector<8x64xf32> to vector<8x32xf32>
    %173 = arith.mulf %172, %163 : vector<8x32xf32>
    %cst_53 = arith.constant dense<0.000000e+00> : vector<8x32xf32>
    %174 = tpu.matmul %173, %12, %cst_53 {dimension_numbers = #tpu.dot_dimension_numbers<[1], [0], [0], [1], [0, 0, 1, 1], [], []>} : vector<8x32xf32>, vector<32x32xf32>, vector<8x32xf32> -> vector<8x32xf32>
    %175 = arith.addf %162, %174 : vector<8x32xf32>
    %176 = math.tanh %175 : vector<8x32xf32>
    %cst_54 = arith.constant 1.000000e+00 : f32
    %177 = vector.broadcast %cst_54 : f32 to vector<8x32xf32>
    %178 = arith.subf %177, %171 : vector<8x32xf32>
    %179 = arith.mulf %178, %163 : vector<8x32xf32>
    %180 = arith.mulf %171, %176 : vector<8x32xf32>
    %181 = arith.addf %179, %180 : vector<8x32xf32>
    %182 = vector.extract_strided_slice %34 {offsets = [48, 0], sizes = [8, 32], strides = [1, 1]} : vector<64x32xf32> to vector<8x32xf32>
    %183 = vector.extract_strided_slice %48 {offsets = [48, 0], sizes = [8, 64], strides = [1, 1]} : vector<64x96xf32> to vector<8x64xf32>
    %184 = vector.extract_strided_slice %48 {offsets = [48, 64], sizes = [8, 32], strides = [1, 1]} : vector<64x96xf32> to vector<8x32xf32>
    %185 = arith.mulf %182, %181 : vector<8x32xf32>
    %cst_55 = arith.constant dense<0.000000e+00> : vector<8x64xf32>
    %186 = tpu.matmul %185, %13, %cst_55 {dimension_numbers = #tpu.dot_dimension_numbers<[1], [0], [0], [1], [0, 0, 1, 1], [], []>} : vector<8x32xf32>, vector<32x64xf32>, vector<8x64xf32> -> vector<8x64xf32>
    %187 = arith.addf %183, %186 : vector<8x64xf32>
    %188 = arith.negf %187 : vector<8x64xf32>
    %189 = math.exp %188 : vector<8x64xf32>
    %cst_56 = arith.constant 1.000000e+00 : f32
    %190 = vector.broadcast %cst_56 : f32 to vector<8x64xf32>
    %191 = arith.addf %190, %189 : vector<8x64xf32>
    %192 = arith.divf %190, %191 : vector<8x64xf32>
    %193 = vector.extract_strided_slice %192 {offsets = [0, 0], sizes = [8, 32], strides = [1, 1]} : vector<8x64xf32> to vector<8x32xf32>
    %194 = vector.extract_strided_slice %192 {offsets = [0, 32], sizes = [8, 32], strides = [1, 1]} : vector<8x64xf32> to vector<8x32xf32>
    %195 = arith.mulf %194, %185 : vector<8x32xf32>
    %cst_57 = arith.constant dense<0.000000e+00> : vector<8x32xf32>
    %196 = tpu.matmul %195, %12, %cst_57 {dimension_numbers = #tpu.dot_dimension_numbers<[1], [0], [0], [1], [0, 0, 1, 1], [], []>} : vector<8x32xf32>, vector<32x32xf32>, vector<8x32xf32> -> vector<8x32xf32>
    %197 = arith.addf %184, %196 : vector<8x32xf32>
    %198 = math.tanh %197 : vector<8x32xf32>
    %cst_58 = arith.constant 1.000000e+00 : f32
    %199 = vector.broadcast %cst_58 : f32 to vector<8x32xf32>
    %200 = arith.subf %199, %193 : vector<8x32xf32>
    %201 = arith.mulf %200, %185 : vector<8x32xf32>
    %202 = arith.mulf %193, %198 : vector<8x32xf32>
    %203 = arith.addf %201, %202 : vector<8x32xf32>
    %204 = vector.extract_strided_slice %34 {offsets = [56, 0], sizes = [8, 32], strides = [1, 1]} : vector<64x32xf32> to vector<8x32xf32>
    %205 = vector.extract_strided_slice %48 {offsets = [56, 0], sizes = [8, 64], strides = [1, 1]} : vector<64x96xf32> to vector<8x64xf32>
    %206 = vector.extract_strided_slice %48 {offsets = [56, 64], sizes = [8, 32], strides = [1, 1]} : vector<64x96xf32> to vector<8x32xf32>
    %207 = arith.mulf %204, %203 : vector<8x32xf32>
    %cst_59 = arith.constant dense<0.000000e+00> : vector<8x64xf32>
    %208 = tpu.matmul %207, %13, %cst_59 {dimension_numbers = #tpu.dot_dimension_numbers<[1], [0], [0], [1], [0, 0, 1, 1], [], []>} : vector<8x32xf32>, vector<32x64xf32>, vector<8x64xf32> -> vector<8x64xf32>
    %209 = arith.addf %205, %208 : vector<8x64xf32>
    %210 = arith.negf %209 : vector<8x64xf32>
    %211 = math.exp %210 : vector<8x64xf32>
    %cst_60 = arith.constant 1.000000e+00 : f32
    %212 = vector.broadcast %cst_60 : f32 to vector<8x64xf32>
    %213 = arith.addf %212, %211 : vector<8x64xf32>
    %214 = arith.divf %212, %213 : vector<8x64xf32>
    %215 = vector.extract_strided_slice %214 {offsets = [0, 0], sizes = [8, 32], strides = [1, 1]} : vector<8x64xf32> to vector<8x32xf32>
    %216 = vector.extract_strided_slice %214 {offsets = [0, 32], sizes = [8, 32], strides = [1, 1]} : vector<8x64xf32> to vector<8x32xf32>
    %217 = arith.mulf %216, %207 : vector<8x32xf32>
    %cst_61 = arith.constant dense<0.000000e+00> : vector<8x32xf32>
    %218 = tpu.matmul %217, %12, %cst_61 {dimension_numbers = #tpu.dot_dimension_numbers<[1], [0], [0], [1], [0, 0, 1, 1], [], []>} : vector<8x32xf32>, vector<32x32xf32>, vector<8x32xf32> -> vector<8x32xf32>
    %219 = arith.addf %206, %218 : vector<8x32xf32>
    %220 = math.tanh %219 : vector<8x32xf32>
    %cst_62 = arith.constant 1.000000e+00 : f32
    %221 = vector.broadcast %cst_62 : f32 to vector<8x32xf32>
    %222 = arith.subf %221, %215 : vector<8x32xf32>
    %223 = arith.mulf %222, %207 : vector<8x32xf32>
    %224 = arith.mulf %215, %220 : vector<8x32xf32>
    %225 = arith.addf %223, %224 : vector<8x32xf32>
    %226 = tpu.concatenate %71, %93, %115, %137, %159, %181, %203, %225 in 1 : vector<8x32xf32>, vector<8x32xf32>, vector<8x32xf32>, vector<8x32xf32>, vector<8x32xf32>, vector<8x32xf32>, vector<8x32xf32>, vector<8x32xf32> -> vector<8x256xf32>
    %c0_63 = arith.constant 0 : index
    %c0_64 = arith.constant 0 : index
    %227 = vector.load %arg3[%c0_63, %c0_64] : memref<8x256xf32, #tpu.memory_space<vmem>>, vector<8x256xf32>
    tpu.vector_store %arg3[%c0_63, %c0_64], %226 {strides = array<i32>} : memref<8x256xf32, #tpu.memory_space<vmem>>, vector<8x256xf32>,
    return
  }
}

</mosaic_0001>

<llo_original>
// kernel: grud_forward.1
$region0: #{grud_forward.1}
  #allocation0 [shape = 'u32[]', space=smem, size = 0x4, offset = 0x4, fixed_abs, tag = 'smem constant byte address 0x4 - core index']
  #allocation1 [shape = 'u32[144,128]{1,0:T(1,128)}', space=vmem, size = 0x12000, scoped, tag = 'internal scratch']
  %s0 = inlined_call_operand.vmem [shape: f32[5,64,32], index: 0, kind: input, shape index: {}]
  %s1 = inlined_call_operand.vmem [shape: f32[64,384], index: 1, kind: input, shape index: {}]
  %s2 = inlined_call_operand.vmem [shape: f32[8,128], index: 2, kind: input, shape index: {}]
  %s3 = inlined_call_operand.vmem [shape: f32[8,256], index: 3, kind: output, shape index: {}]
  %s4 = sld [smem:[#allocation0]]
  $region22: #{grud_forward.1} parent=0
    _
  %s6 = ssub.s32 1, %s4
  %s7 = scalar_select 0, %s6, %s4
  // Predicated region
  $region2: #{grud_forward.1} parent=0 // pred_check
    _
  $region3: #{grud_forward.1} parent=0 // pred_check_branch
    %9 = sbr.rel (0) target = $region5
  $region4: #{grud_forward.1} parent=0 // pred_region
    _
  $region5: #{grud_forward.1} parent=0 // pred_fallthru
    _
  // Predicated region
  $region6: #{grud_forward.1} parent=0 // pred_check
    _
  $region7: #{grud_forward.1} parent=0 // pred_check_branch
    %11 = sbr.rel (0) target = $region9
  $region8: #{grud_forward.1} parent=0 // pred_region
    _
  $region9: #{grud_forward.1} parent=0 // pred_fallthru
    _
  // Predicated region
  $region10: #{grud_forward.1} parent=0 // pred_check
    _
  $region11: #{grud_forward.1} parent=0 // pred_check_branch
    %13 = sbr.rel (0) target = $region13
  $region12: #{grud_forward.1} parent=0 // pred_region
    _
  $region13: #{grud_forward.1} parent=0 // pred_fallthru
    _
  %v14 = vld [vmem:[%s0] sm:$0xff]
  %v15 = vld [vmem:[%s0 + $0x8] sm:$0xff]
  %v16 = vld [vmem:[%s0 + $0x10] sm:$0xff]
  %v17 = vld [vmem:[%s0 + $0x18] sm:$0xff]
  %v18 = vld [vmem:[%s0 + $0x20] sm:$0xff]
  %v19 = vld [vmem:[%s0 + $0x28] sm:$0xff]
  %v20 = vld [vmem:[%s0 + $0x30] sm:$0xff]
  %v21 = vld [vmem:[%s0 + $0x38] sm:$0xff]
  %s22 = scalar_lea.vmem %s0, 64
  %v23 = vld [vmem:[%s22] sm:$0xff]
  %v24 = vld [vmem:[%s22 + $0x8] sm:$0xff]
  %v25 = vld [vmem:[%s22 + $0x10] sm:$0xff]
  %v26 = vld [vmem:[%s22 + $0x18] sm:$0xff]
  %v27 = vld [vmem:[%s22 + $0x20] sm:$0xff]
  %v28 = vld [vmem:[%s22 + $0x28] sm:$0xff]
  %v29 = vld [vmem:[%s22 + $0x30] sm:$0xff]
  %v30 = vld [vmem:[%s22 + $0x38] sm:$0xff]
  %s31 = scalar_lea.vmem %s0, 128
  %v32 = vld [vmem:[%s31] sm:$0xff]
  %v33 = vld [vmem:[%s31 + $0x8] sm:$0xff]
  %v34 = vld [vmem:[%s31 + $0x10] sm:$0xff]
  %v35 = vld [vmem:[%s31 + $0x18] sm:$0xff]
  %v36 = vld [vmem:[%s31 + $0x20] sm:$0xff]
  %v37 = vld [vmem:[%s31 + $0x28] sm:$0xff]
  %v38 = vld [vmem:[%s31 + $0x30] sm:$0xff]
  %v39 = vld [vmem:[%s31 + $0x38] sm:$0xff]
  %s40 = scalar_lea.vmem %s0, 192
  %v41 = vld [vmem:[%s40] sm:$0xff]
  %v42 = vld [vmem:[%s40 + $0x8] sm:$0xff]
  %v43 = vld [vmem:[%s40 + $0x10] sm:$0xff]
  %v44 = vld [vmem:[%s40 + $0x18] sm:$0xff]
  %v45 = vld [vmem:[%s40 + $0x20] sm:$0xff]
  %v46 = vld [vmem:[%s40 + $0x28] sm:$0xff]
  %v47 = vld [vmem:[%s40 + $0x30] sm:$0xff]
  %v48 = vld [vmem:[%s40 + $0x38] sm:$0xff]
  %s49 = scalar_lea.vmem %s0, 256
  %v50 = vld [vmem:[%s49] sm:$0xff]
  %v51 = vld [vmem:[%s49 + $0x8] sm:$0xff]
  %v52 = vld [vmem:[%s49 + $0x10] sm:$0xff]
  %v53 = vld [vmem:[%s49 + $0x18] sm:$0xff]
  %v54 = vld [vmem:[%s49 + $0x20] sm:$0xff]
  %v55 = vld [vmem:[%s49 + $0x28] sm:$0xff]
  %v56 = vld [vmem:[%s49 + $0x30] sm:$0xff]
  %v57 = vld [vmem:[%s49 + $0x38] sm:$0xff]
  %v58 = vld [vmem:[%s1] sm:$0xff]
  %v59 = vld [vmem:[%s1 + $0x18] sm:$0xff]
  %v60 = vld [vmem:[%s1 + $0x30] sm:$0xff]
  %v61 = vld [vmem:[%s1 + $0x48] sm:$0xff]
  %v62 = vld [vmem:[%s1 + $0x60] sm:$0xff]
  %v63 = vld [vmem:[%s1 + $0x78] sm:$0xff]
  %v64 = vld [vmem:[%s1 + $0x90] sm:$0xff]
  %v65 = vld [vmem:[%s1 + $0xa8] sm:$0xff]
  %v66 = vld [vmem:[%s1 + $0x8] sm:$0xff]
  %v67 = vld [vmem:[%s1 + $0x20] sm:$0xff]
  %v68 = vld [vmem:[%s1 + $0x38] sm:$0xff]
  %v69 = vld [vmem:[%s1 + $0x50] sm:$0xff]
  %v70 = vld [vmem:[%s1 + $0x68] sm:$0xff]
  %v71 = vld [vmem:[%s1 + $0x80] sm:$0xff]
  %v72 = vld [vmem:[%s1 + $0x98] sm:$0xff]
  %v73 = vld [vmem:[%s1 + $0xb0] sm:$0xff]
  %v74 = vld [vmem:[%s1 + $0x10] sm:$0xff]
  %v75 = vld [vmem:[%s1 + $0x28] sm:$0xff]
  %v76 = vld [vmem:[%s1 + $0x40] sm:$0xff]
  %v77 = vld [vmem:[%s1 + $0x58] sm:$0xff]
  %v78 = vld [vmem:[%s2] sm:$0x1]
  %v79 = vld [vmem:[%s2 + $0x1] sm:$0x1]
  %v80 = vld [vmem:[%s2 + $0x2] sm:$0x1]
  %v81 = vld [vmem:[%s2 + $0x3] sm:$0x1]
  %v82 = vlaneseq
  %v83 = vshrl.u32 %v82, 7
  %v84 = vsub.s32 0, %v83
  %v85 = vrot.slane %v80, %v84
  %v86 = vmul.f32 %v41, %v85
  %v87 = vmul.f32 %v42, %v85
  %v88 = vmul.f32 %v43, %v85
  %v89 = vmul.f32 %v44, %v85
  %v90 = vmul.f32 %v45, %v85
  %v91 = vmul.f32 %v46, %v85
  %v92 = vmul.f32 %v47, %v85
  %v93 = vmul.f32 %v48, %v85
  %v94 = vlaneseq
  %v95 = vshrl.u32 %v94, 7
  %v96 = vsub.s32 0, %v95
  %v97 = vrot.slane %v78, %v96
  %v98 = vadd.f32 %v86, %v97
  %v99 = vadd.f32 %v87, %v97
  %v100 = vadd.f32 %v88, %v97
  %v101 = vadd.f32 %v89, %v97
  %v102 = vadd.f32 %v90, %v97
  %v103 = vadd.f32 %v91, %v97
  %v104 = vadd.f32 %v92, %v97
  %v105 = vadd.f32 %v93, %v97
  %v106 = vmax.f32 %v98, 0.0
  %v107 = vmax.f32 %v99, 0.0
  %v108 = vmax.f32 %v100, 0.0
  %v109 = vmax.f32 %v101, 0.0
  %v110 = vmax.f32 %v102, 0.0
  %v111 = vmax.f32 %v103, 0.0
  %v112 = vmax.f32 %v104, 0.0
  %v113 = vmax.f32 %v105, 0.0
  %v114 = vsub.f32 0.0, %v106
  %v115 = vsub.f32 0.0, %v107
  %v116 = vsub.f32 0.0, %v108
  %v117 = vsub.f32 0.0, %v109
  %v118 = vsub.f32 0.0, %v110
  %v119 = vsub.f32 0.0, %v111
  %v120 = vsub.f32 0.0, %v112
  %v121 = vsub.f32 0.0, %v113
  %v122 = vmul.f32 %v114, 1.442695
  %v123 = vpow.pop %v122
  %v124 = vmul.f32 %v115, 1.442695
  %v125 = vpow.pop %v124
  %v126 = vmul.f32 %v116, 1.442695
  %v127 = vpow.pop %v126
  %v128 = vmul.f32 %v117, 1.442695
  %v129 = vpow.pop %v128
  %v130 = vmul.f32 %v118, 1.442695
  %v131 = vpow.pop %v130
  %v132 = vmul.f32 %v119, 1.442695
  %v133 = vpow.pop %v132
  %v134 = vmul.f32 %v120, 1.442695
  %v135 = vpow.pop %v134
  %v136 = vmul.f32 %v121, 1.442695
  %v137 = vpow.pop %v136
  %v138 = vlaneseq
  %v139 = vshrl.u32 %v138, 7
  %v140 = vsub.s32 0, %v139
  %v141 = vrot.slane %v79, %v140
  %vm142 = vcmask 261120
  %v144 = vsel %vm142, %v41, 0
  %v147 = vsel %vm142, %v42, 0
  %v150 = vsel %vm142, %v43, 0
  %v153 = vsel %vm142, %v44, 0
  %v156 = vsel %vm142, %v45, 0
  %v159 = vsel %vm142, %v46, 0
  %v162 = vsel %vm142, %v47, 0
  %v165 = vsel %vm142, %v48, 0
  %167 = vmatprep.subr.mxu0 0.0
  %168 = vmatpush1.msra.mxu0 %v66
  %169 = vmatprep.subr.mxu0 0.0
  %170 = vmatpush1.msra.mxu0 %v67
  %171 = vmatprep.subr.mxu0 0.0
  %172 = vmatpush1.msra.mxu0 %v68
  %173 = vmatprep.subr.mxu0 0.0
  %174 = vmatpush1.msra.mxu0 %v69
  %175 = vmatprep.subr.mxu0 0.0
  %176 = vmatpush1.msra.mxu0 0.0
  %177 = vmatprep.subr.mxu0 0.0
  %178 = vmatpush1.msra.mxu0 0.0
  %179 = vmatprep.subr.mxu0 0.0
  %180 = vmatpush1.msra.mxu0 0.0
  %181 = vmatprep.subr.mxu0 0.0
  %182 = vmatpush1.msra.mxu0 0.0
  %183 = vmatprep.subr.mxu0 0.0
  %184 = vmatpush1.msra.mxu0 0.0
  %185 = vmatprep.subr.mxu0 0.0
  %186 = vmatpush1.msra.mxu0 0.0
  %187 = vmatprep.subr.mxu0 0.0
  %188 = vmatpush1.msra.mxu0 0.0
  %189 = vmatprep.subr.mxu0 0.0
  %190 = vmatpush1.msra.mxu0 0.0
  %191 = vmatprep.subr.mxu0 0.0
  %192 = vmatpush1.msra.mxu0 0.0
  %193 = vmatprep.subr.mxu0 0.0
  %194 = vmatpush1.msra.mxu0 0.0
  %195 = vmatprep.subr.mxu0 0.0
  %196 = vmatpush1.msra.mxu0 0.0
  %197 = vmatprep.subr.mxu0 0.0
  %198 = vmatpush1.msra.mxu0 0.0
  %199 = vmatprep.subr.mxu0 0.0
  %200 = vmatpush1.msra.mxu0 0.0
  %201 = vmatprep.subr.mxu0 0.0
  %202 = vmatpush1.msra.mxu0 0.0
  %203 = vmatprep.subr.mxu0 0.0
  %204 = vmatpush1.msra.mxu0 0.0
  %205 = vmatprep.subr.mxu0 0.0
  %206 = vmatpush1.msra.mxu0 0.0
  %207 = vmatprep.subr.mxu0 0.0
  %208 = vmatpush1.msra.mxu0 0.0
  %209 = vmatprep.subr.mxu0 0.0
  %210 = vmatpush1.msra.mxu0 0.0
  %211 = vmatprep.subr.mxu0 0.0
  %212 = vmatpush1.msra.mxu0 0.0
  %213 = vmatprep.subr.mxu0 0.0
  %214 = vmatpush1.msra.mxu0 0.0
  %215 = vmatprep.subr.mxu0 0.0
  %216 = vmatpush1.msra.mxu0 0.0
  %217 = vmatprep.subr.mxu0 0.0
  %218 = vmatpush1.msra.mxu0 0.0
  %219 = vmatprep.subr.mxu0 0.0
  %220 = vmatpush1.msra.mxu0 0.0
  %221 = vmatprep.subr.mxu0 0.0
  %222 = vmatpush1.msra.mxu0 0.0
  %223 = vmatprep.subr.mxu0 0.0
  %224 = vmatpush1.msra.mxu0 0.0
  %225 = vmatprep.subr.mxu0 0.0
  %226 = vmatpush1.msra.mxu0 0.0
  %227 = vmatprep.subr.mxu0 0.0
  %228 = vmatpush1.msra.mxu0 0.0
  %229 = vmatprep.subr.mxu0 0.0
  %230 = vmatpush1.msra.mxu0 0.0
  %231 = vmatprep.mubr.f32.mxu0 0.0
  %232 = vmatmul.mubr.f32.gmra.mrb[0].mxu0 %v144
  %v233 = vpop.f32.mrb[0].mxu0
  %v234 = vadd.f32 %v141, %v233
  %v235 = vpop.f32.mrb[0].mxu0
  %236 = vmatprep.mubr.f32.mxu0 0.0
  %237 = vmatmul.mubr.f32.gmra.mrb[0].mxu0 %v147
  %v238 = vpop.f32.mrb[0].mxu0
  %v239 = vadd.f32 %v141, %v238
  %v240 = vpop.f32.mrb[0].mxu0
  %241 = vmatprep.mubr.f32.mxu0 0.0
  %242 = vmatmul.mubr.f32.gmra.mrb[0].mxu0 %v150
  %v243 = vpop.f32.mrb[0].mxu0
  %v244 = vadd.f32 %v141, %v243
  %v245 = vpop.f32.mrb[0].mxu0
  %246 = vmatprep.mubr.f32.mxu0 0.0
  %247 = vmatmul.mubr.f32.gmra.mrb[0].mxu0 %v153
  %v248 = vpop.f32.mrb[0].mxu0
  %v249 = vadd.f32 %v141, %v248
  %v250 = vpop.f32.mrb[0].mxu0
  %251 = vmatprep.mubr.f32.mxu0 0.0
  %252 = vmatmul.mubr.f32.gmra.mrb[0].mxu0 %v156
  %v253 = vpop.f32.mrb[0].mxu0
  %v254 = vadd.f32 %v141, %v253
  %v255 = vpop.f32.mrb[0].mxu0
  %256 = vmatprep.mubr.f32.mxu0 0.0
  %257 = vmatmul.mubr.f32.gmra.mrb[0].mxu0 %v159
  %v258 = vpop.f32.mrb[0].mxu0
  %v259 = vadd.f32 %v141, %v258
  %v260 = vpop.f32.mrb[0].mxu0
  %261 = vmatprep.mubr.f32.mxu0 0.0
  %262 = vmatmul.mubr.f32.gmra.mrb[0].mxu0 %v162
  %v263 = vpop.f32.mrb[0].mxu0
  %v264 = vadd.f32 %v141, %v263
  %v265 = vpop.f32.mrb[0].mxu0
  %266 = vmatprep.mubr.f32.mxu0 0.0
  %267 = vmatmul.mubr.f32.gmra.mrb[0].mxu0 %v165
  %v268 = vpop.f32.mrb[0].mxu0
  %v269 = vadd.f32 %v141, %v268
  %v270 = vpop.f32.mrb[0].mxu0
  %271 = vdwg.mxu0
  %v272 = vmax.f32 %v234, 0.0
  %v273 = vmax.f32 %v239, 0.0
  %v274 = vmax.f32 %v244, 0.0
  %v275 = vmax.f32 %v249, 0.0
  %v276 = vmax.f32 %v254, 0.0
  %v277 = vmax.f32 %v259, 0.0
  %v278 = vmax.f32 %v264, 0.0
  %v279 = vmax.f32 %v269, 0.0
  %v280 = vsub.f32 0.0, %v272
  %v281 = vsub.f32 0.0, %v273
  %v282 = vsub.f32 0.0, %v274
  %v283 = vsub.f32 0.0, %v275
  %v284 = vsub.f32 0.0, %v276
  %v285 = vsub.f32 0.0, %v277
  %v286 = vsub.f32 0.0, %v278
  %v287 = vsub.f32 0.0, %v279
  %v288 = vmul.f32 %v280, 1.442695
  %v289 = vpow.pop %v288
  %v290 = vmul.f32 %v281, 1.442695
  %v291 = vpow.pop %v290
  %v292 = vmul.f32 %v282, 1.442695
  %v293 = vpow.pop %v292
  %v294 = vmul.f32 %v283, 1.442695
  %v295 = vpow.pop %v294
  %v296 = vmul.f32 %v284, 1.442695
  %v297 = vpow.pop %v296
  %v298 = vmul.f32 %v285, 1.442695
  %v299 = vpow.pop %v298
  %v300 = vmul.f32 %v286, 1.442695
  %v301 = vpow.pop %v300
  %v302 = vmul.f32 %v287, 1.442695
  %v303 = vpow.pop %v302
  %v304 = vmul.f32 %v32, %v14
  %v305 = vmul.f32 %v33, %v15
  %v306 = vmul.f32 %v34, %v16
  %v307 = vmul.f32 %v35, %v17
  %v308 = vmul.f32 %v36, %v18
  %v309 = vmul.f32 %v37, %v19
  %v310 = vmul.f32 %v38, %v20
  %v311 = vmul.f32 %v39, %v21
  %v312 = vsub.f32 1.0, %v32
  %v313 = vsub.f32 1.0, %v33
  %v314 = vsub.f32 1.0, %v34
  %v315 = vsub.f32 1.0, %v35
  %v316 = vsub.f32 1.0, %v36
  %v317 = vsub.f32 1.0, %v37
  %v318 = vsub.f32 1.0, %v38
  %v319 = vsub.f32 1.0, %v39
  %v320 = vmul.f32 %v123, %v23
  %v321 = vmul.f32 %v125, %v24
  %v322 = vmul.f32 %v127, %v25
  %v323 = vmul.f32 %v129, %v26
  %v324 = vmul.f32 %v131, %v27
  %v325 = vmul.f32 %v133, %v28
  %v326 = vmul.f32 %v135, %v29
  %v327 = vmul.f32 %v137, %v30
  %v328 = vsub.f32 1.0, %v123
  %v329 = vsub.f32 1.0, %v125
  %v330 = vsub.f32 1.0, %v127
  %v331 = vsub.f32 1.0, %v129
  %v332 = vsub.f32 1.0, %v131
  %v333 = vsub.f32 1.0, %v133
  %v334 = vsub.f32 1.0, %v135
  %v335 = vsub.f32 1.0, %v137
  %v336 = vmul.f32 %v328, %v50
  %v337 = vmul.f32 %v329, %v51
  %v338 = vmul.f32 %v330, %v52
  %v339 = vmul.f32 %v331, %v53
  %v340 = vmul.f32 %v332, %v54
  %v341 = vmul.f32 %v333, %v55
  %v342 = vmul.f32 %v334, %v56
  %v343 = vmul.f32 %v335, %v57
  %v344 = vadd.f32 %v320, %v336
  %v345 = vadd.f32 %v321, %v337
  %v346 = vadd.f32 %v322, %v338
  %v347 = vadd.f32 %v323, %v339
  %v348 = vadd.f32 %v324, %v340
  %v349 = vadd.f32 %v325, %v341
  %v350 = vadd.f32 %v326, %v342
  %v351 = vadd.f32 %v327, %v343
  %v352 = vmul.f32 %v312, %v344
  %v353 = vmul.f32 %v313, %v345
  %v354 = vmul.f32 %v314, %v346
  %v355 = vmul.f32 %v315, %v347
  %v356 = vmul.f32 %v316, %v348
  %v357 = vmul.f32 %v317, %v349
  %v358 = vmul.f32 %v318, %v350
  %v359 = vmul.f32 %v319, %v351
  %v360 = vadd.f32 %v304, %v352
  %v361 = vadd.f32 %v305, %v353
  %v362 = vadd.f32 %v306, %v354
  %v363 = vadd.f32 %v307, %v355
  %v364 = vadd.f32 %v308, %v356
  %v365 = vadd.f32 %v309, %v357
  %v366 = vadd.f32 %v310, %v358
  %v367 = vadd.f32 %v311, %v359
  %376 = vrot.lane.b32.xlu0 %v32, 32
  %v377 = vpop.permute.xlu0 %376
  %378 = vrot.lane.b32.xlu0 %v33, 32
  %v379 = vpop.permute.xlu0 %378
  %380 = vrot.lane.b32.xlu0 %v34, 32
  %v381 = vpop.permute.xlu0 %380
  %382 = vrot.lane.b32.xlu0 %v35, 32
  %v383 = vpop.permute.xlu0 %382
  %384 = vrot.lane.b32.xlu0 %v36, 32
  %v385 = vpop.permute.xlu0 %384
  %386 = vrot.lane.b32.xlu0 %v37, 32
  %v387 = vpop.permute.xlu0 %386
  %388 = vrot.lane.b32.xlu0 %v38, 32
  %v389 = vpop.permute.xlu0 %388
  %390 = vrot.lane.b32.xlu0 %v39, 32
  %v391 = vpop.permute.xlu0 %390
  %v400 = vsel %vm142, %v360, %v377
  %v401 = vsel %vm142, %v361, %v379
  %v402 = vsel %vm142, %v362, %v381
  %v403 = vsel %vm142, %v363, %v383
  %v404 = vsel %vm142, %v364, %v385
  %v405 = vsel %vm142, %v365, %v387
  %v406 = vsel %vm142, %v366, %v389
  %v407 = vsel %vm142, %v367, %v391
  %v408 = vlaneseq
  %v409 = vshrl.u32 %v408, 7
  %v410 = vsub.s32 0, %v409
  %v411 = vrot.slane %v81, %v410
  %vm412 = vcmask 523264
  %v414 = vsel %vm412, %v400, 0
  %v417 = vsel %vm412, %v401, 0
  %v420 = vsel %vm412, %v402, 0
  %v423 = vsel %vm412, %v403, 0
  %v426 = vsel %vm412, %v404, 0
  %v429 = vsel %vm412, %v405, 0
  %v432 = vsel %vm412, %v406, 0
  %v435 = vsel %vm412, %v407, 0
  %437 = vmatprep.subr.mxu0 0.0
  %438 = vmatpush1.msra.mxu0 %v58
  %439 = vmatprep.subr.mxu0 0.0
  %440 = vmatpush1.msra.mxu0 %v59
  %441 = vmatprep.subr.mxu0 0.0
  %442 = vmatpush1.msra.mxu0 %v60
  %443 = vmatprep.subr.mxu0 0.0
  %444 = vmatpush1.msra.mxu0 %v61
  %445 = vmatprep.subr.mxu0 0.0
  %446 = vmatpush1.msra.mxu0 %v62
  %447 = vmatprep.subr.mxu0 0.0
  %448 = vmatpush1.msra.mxu0 %v63
  %449 = vmatprep.subr.mxu0 0.0
  %450 = vmatpush1.msra.mxu0 %v64
  %451 = vmatprep.subr.mxu0 0.0
  %452 = vmatpush1.msra.mxu0 %v65
  %453 = vmatprep.subr.mxu0 0.0
  %454 = vmatpush1.msra.mxu0 0.0
  %455 = vmatprep.subr.mxu0 0.0
  %456 = vmatpush1.msra.mxu0 0.0
  %457 = vmatprep.subr.mxu0 0.0
  %458 = vmatpush1.msra.mxu0 0.0
  %459 = vmatprep.subr.mxu0 0.0
  %460 = vmatpush1.msra.mxu0 0.0
  %461 = vmatprep.subr.mxu0 0.0
  %462 = vmatpush1.msra.mxu0 0.0
  %463 = vmatprep.subr.mxu0 0.0
  %464 = vmatpush1.msra.mxu0 0.0
  %465 = vmatprep.subr.mxu0 0.0
  %466 = vmatpush1.msra.mxu0 0.0
  %467 = vmatprep.subr.mxu0 0.0
  %468 = vmatpush1.msra.mxu0 0.0
  %469 = vmatprep.subr.mxu0 0.0
  %470 = vmatpush1.msra.mxu0 0.0
  %471 = vmatprep.subr.mxu0 0.0
  %472 = vmatpush1.msra.mxu0 0.0
  %473 = vmatprep.subr.mxu0 0.0
  %474 = vmatpush1.msra.mxu0 0.0
  %475 = vmatprep.subr.mxu0 0.0
  %476 = vmatpush1.msra.mxu0 0.0
  %477 = vmatprep.subr.mxu0 0.0
  %478 = vmatpush1.msra.mxu0 0.0
  %479 = vmatprep.subr.mxu0 0.0
  %480 = vmatpush1.msra.mxu0 0.0
  %481 = vmatprep.subr.mxu0 0.0
  %482 = vmatpush1.msra.mxu0 0.0
  %483 = vmatprep.subr.mxu0 0.0
  %484 = vmatpush1.msra.mxu0 0.0
  %485 = vmatprep.subr.mxu0 0.0
  %486 = vmatpush1.msra.mxu0 0.0
  %487 = vmatprep.subr.mxu0 0.0
  %488 = vmatpush1.msra.mxu0 0.0
  %489 = vmatprep.subr.mxu0 0.0
  %490 = vmatpush1.msra.mxu0 0.0
  %491 = vmatprep.subr.mxu0 0.0
  %492 = vmatpush1.msra.mxu0 0.0
  %493 = vmatprep.subr.mxu0 0.0
  %494 = vmatpush1.msra.mxu0 0.0
  %495 = vmatprep.subr.mxu0 0.0
  %496 = vmatpush1.msra.mxu0 0.0
  %497 = vmatprep.subr.mxu0 0.0
  %498 = vmatpush1.msra.mxu0 0.0
  %499 = vmatprep.subr.mxu0 0.0
  %500 = vmatpush1.msra.mxu0 0.0
  %501 = vmatprep.mubr.f32.mxu0 0.0
  %502 = vmatmul.mubr.f32.gmra.mrb[0].mxu0 %v414
  %v503 = vpop.f32.mrb[0].mxu0
  %v504 = vadd.f32 %v411, %v503
  %v505 = vpop.f32.mrb[0].mxu0
  %506 = vmatprep.mubr.f32.mxu0 0.0
  %507 = vmatmul.mubr.f32.gmra.mrb[0].mxu0 %v417
  %v508 = vpop.f32.mrb[0].mxu0
  %v509 = vadd.f32 %v411, %v508
  %v510 = vpop.f32.mrb[0].mxu0
  %511 = vmatprep.mubr.f32.mxu0 0.0
  %512 = vmatmul.mubr.f32.gmra.mrb[0].mxu0 %v420
  %v513 = vpop.f32.mrb[0].mxu0
  %v514 = vadd.f32 %v411, %v513
  %v515 = vpop.f32.mrb[0].mxu0
  %516 = vmatprep.mubr.f32.mxu0 0.0
  %517 = vmatmul.mubr.f32.gmra.mrb[0].mxu0 %v423
  %v518 = vpop.f32.mrb[0].mxu0
  %v519 = vadd.f32 %v411, %v518
  %v520 = vpop.f32.mrb[0].mxu0
  %521 = vmatprep.mubr.f32.mxu0 0.0
  %522 = vmatmul.mubr.f32.gmra.mrb[0].mxu0 %v426
  %v523 = vpop.f32.mrb[0].mxu0
  %v524 = vadd.f32 %v411, %v523
  %v525 = vpop.f32.mrb[0].mxu0
  %526 = vmatprep.mubr.f32.mxu0 0.0
  %527 = vmatmul.mubr.f32.gmra.mrb[0].mxu0 %v429
  %v528 = vpop.f32.mrb[0].mxu0
  %v529 = vadd.f32 %v411, %v528
  %v530 = vpop.f32.mrb[0].mxu0
  %531 = vmatprep.mubr.f32.mxu0 0.0
  %532 = vmatmul.mubr.f32.gmra.mrb[0].mxu0 %v432
  %v533 = vpop.f32.mrb[0].mxu0
  %v534 = vadd.f32 %v411, %v533
  %v535 = vpop.f32.mrb[0].mxu0
  %536 = vmatprep.mubr.f32.mxu0 0.0
  %537 = vmatmul.mubr.f32.gmra.mrb[0].mxu0 %v435
  %v538 = vpop.f32.mrb[0].mxu0
  %v539 = vadd.f32 %v411, %v538
  %v540 = vpop.f32.mrb[0].mxu0
  %541 = vdwg.mxu0
  %v542 = vmul.f32 %v289, 0.0
  %v544 = vsel %vm142, %v542, 0
  %546 = vmatprep.subr.mxu0 0.0
  %547 = vmatpush1.msra.mxu0 %v74
  %548 = vmatprep.subr.mxu0 0.0
  %549 = vmatpush1.msra.mxu0 %v75
  %550 = vmatprep.subr.mxu0 0.0
  %551 = vmatpush1.msra.mxu0 %v76
  %552 = vmatprep.subr.mxu0 0.0
  %553 = vmatpush1.msra.mxu0 %v77
  %554 = vmatprep.subr.mxu0 0.0
  %555 = vmatpush1.msra.mxu0 0.0
  %556 = vmatprep.subr.mxu0 0.0
  %557 = vmatpush1.msra.mxu0 0.0
  %558 = vmatprep.subr.mxu0 0.0
  %559 = vmatpush1.msra.mxu0 0.0
  %560 = vmatprep.subr.mxu0 0.0
  %561 = vmatpush1.msra.mxu0 0.0
  %562 = vmatprep.subr.mxu0 0.0
  %563 = vmatpush1.msra.mxu0 0.0
  %564 = vmatprep.subr.mxu0 0.0
  %565 = vmatpush1.msra.mxu0 0.0
  %566 = vmatprep.subr.mxu0 0.0
  %567 = vmatpush1.msra.mxu0 0.0
  %568 = vmatprep.subr.mxu0 0.0
  %569 = vmatpush1.msra.mxu0 0.0
  %570 = vmatprep.subr.mxu0 0.0
  %571 = vmatpush1.msra.mxu0 0.0
  %572 = vmatprep.subr.mxu0 0.0
  %573 = vmatpush1.msra.mxu0 0.0
  %574 = vmatprep.subr.mxu0 0.0
  %575 = vmatpush1.msra.mxu0 0.0
  %576 = vmatprep.subr.mxu0 0.0
  %577 = vmatpush1.msra.mxu0 0.0
  %578 = vmatprep.subr.mxu0 0.0
  %579 = vmatpush1.msra.mxu0 0.0
  %580 = vmatprep.subr.mxu0 0.0
  %581 = vmatpush1.msra.mxu0 0.0
  %582 = vmatprep.subr.mxu0 0.0
  %583 = vmatpush1.msra.mxu0 0.0
  %584 = vmatprep.subr.mxu0 0.0
  %585 = vmatpush1.msra.mxu0 0.0
  %586 = vmatprep.subr.mxu0 0.0
  %587 = vmatpush1.msra.mxu0 0.0
  %588 = vmatprep.subr.mxu0 0.0
  %589 = vmatpush1.msra.mxu0 0.0
  %590 = vmatprep.subr.mxu0 0.0
  %591 = vmatpush1.msra.mxu0 0.0
  %592 = vmatprep.subr.mxu0 0.0
  %593 = vmatpush1.msra.mxu0 0.0
  %594 = vmatprep.subr.mxu0 0.0
  %595 = vmatpush1.msra.mxu0 0.0
  %596 = vmatprep.subr.mxu0 0.0
  %597 = vmatpush1.msra.mxu0 0.0
  %598 = vmatprep.subr.mxu0 0.0
  %599 = vmatpush1.msra.mxu0 0.0
  %600 = vmatprep.subr.mxu0 0.0
  %601 = vmatpush1.msra.mxu0 0.0
  %602 = vmatprep.subr.mxu0 0.0
  %603 = vmatpush1.msra.mxu0 0.0
  %604 = vmatprep.subr.mxu0 0.0
  %605 = vmatpush1.msra.mxu0 0.0
  %606 = vmatprep.subr.mxu0 0.0
  %607 = vmatpush1.msra.mxu0 0.0
  %608 = vmatprep.subr.mxu0 0.0
  %609 = vmatpush1.msra.mxu0 0.0
  %610 = vmatprep.mubr.f32.mxu0 0.0
  %611 = vmatmul.mubr.f32.gmra.mrb[0].mxu0 %v544
  %v612 = vpop.f32.mrb[0].mxu0
  %v613 = vadd.f32 0.0, %v612
  %v614 = vpop.f32.mrb[0].mxu0
  %615 = vdwg.mxu0
  %v616 = vadd.f32 %v504, %v613
  %v617 = vxor.u32 %v616, 2147483648
  %v618 = vmul.f32 %v617, 1.442695
  %v619 = vpow.pop %v618
  %v620 = vadd.f32 %v619, 1.0
  %v621 = vrcp.pop %v620
  %v622 = vmul.f32 1.0, %v621
  %623 = vrot.lane.b32.xlu0 %v542, 32
  %v624 = vpop.permute.xlu0 %623
  %v626 = vmul.f32 %v622, %v624
  %628 = vrot.lane.b32.xlu0 %v626, 96
  %v629 = vpop.permute.xlu0 %628
  %v630 = vsel %vm142, %v629, 0
  %632 = vmatprep.subr.mxu0 0.0
  %633 = vmatpush1.msra.mxu0 %v70
  %634 = vmatprep.subr.mxu0 0.0
  %635 = vmatpush1.msra.mxu0 %v71
  %636 = vmatprep.subr.mxu0 0.0
  %637 = vmatpush1.msra.mxu0 %v72
  %638 = vmatprep.subr.mxu0 0.0
  %639 = vmatpush1.msra.mxu0 %v73
  %640 = vmatprep.subr.mxu0 0.0
  %641 = vmatpush1.msra.mxu0 0.0
  %642 = vmatprep.subr.mxu0 0.0
  %643 = vmatpush1.msra.mxu0 0.0
  %644 = vmatprep.subr.mxu0 0.0
  %645 = vmatpush1.msra.mxu0 0.0
  %646 = vmatprep.subr.mxu0 0.0
  %647 = vmatpush1.msra.mxu0 0.0
  %648 = vmatprep.subr.mxu0 0.0
  %649 = vmatpush1.msra.mxu0 0.0
  %650 = vmatprep.subr.mxu0 0.0
  %651 = vmatpush1.msra.mxu0 0.0
  %652 = vmatprep.subr.mxu0 0.0
  %653 = vmatpush1.msra.mxu0 0.0
  %654 = vmatprep.subr.mxu0 0.0
  %655 = vmatpush1.msra.mxu0 0.0
  %656 = vmatprep.subr.mxu0 0.0
  %657 = vmatpush1.msra.mxu0 0.0
  %658 = vmatprep.subr.mxu0 0.0
  %659 = vmatpush1.msra.mxu0 0.0
  %660 = vmatprep.subr.mxu0 0.0
  %661 = vmatpush1.msra.mxu0 0.0
  %662 = vmatprep.subr.mxu0 0.0
  %663 = vmatpush1.msra.mxu0 0.0
  %664 = vmatprep.subr.mxu0 0.0
  %665 = vmatpush1.msra.mxu0 0.0
  %666 = vmatprep.subr.mxu0 0.0
  %667 = vmatpush1.msra.mxu0 0.0
  %668 = vmatprep.subr.mxu0 0.0
  %669 = vmatpush1.msra.mxu0 0.0
  %670 = vmatprep.subr.mxu0 0.0
  %671 = vmatpush1.msra.mxu0 0.0
  %672 = vmatprep.subr.mxu0 0.0
  %673 = vmatpush1.msra.mxu0 0.0
  %674 = vmatprep.subr.mxu0 0.0
  %675 = vmatpush1.msra.mxu0 0.0
  %676 = vmatprep.subr.mxu0 0.0
  %677 = vmatpush1.msra.mxu0 0.0
  %678 = vmatprep.subr.mxu0 0.0
  %679 = vmatpush1.msra.mxu0 0.0
  %680 = vmatprep.subr.mxu0 0.0
  %681 = vmatpush1.msra.mxu0 0.0
  %682 = vmatprep.subr.mxu0 0.0
  %683 = vmatpush1.msra.mxu0 0.0
  %684 = vmatprep.subr.mxu0 0.0
  %685 = vmatpush1.msra.mxu0 0.0
  %686 = vmatprep.subr.mxu0 0.0
  %687 = vmatpush1.msra.mxu0 0.0
  %688 = vmatprep.subr.mxu0 0.0
  %689 = vmatpush1.msra.mxu0 0.0
  %690 = vmatprep.subr.mxu0 0.0
  %691 = vmatpush1.msra.mxu0 0.0
  %692 = vmatprep.subr.mxu0 0.0
  %693 = vmatpush1.msra.mxu0 0.0
  %694 = vmatprep.subr.mxu0 0.0
  %695 = vmatpush1.msra.mxu0 0.0
  %696 = vmatprep.mubr.f32.mxu0 0.0
  %697 = vmatmul.mubr.f32.gmra.mrb[0].mxu0 %v630
  %v698 = vpop.f32.mrb[0].mxu0
  %v699 = vadd.f32 0.0, %v698
  %v700 = vpop.f32.mrb[0].mxu0
  %701 = vdwg.mxu0
  %703 = vrot.lane.b32.xlu0 %v699, 64
  %v704 = vpop.permute.xlu0 %703
  %v706 = vadd.f32 %v504, %v704
  %v707 = vtanh.pop %v706
  %v708 = vsub.f32 1.0, %v622
  %v709 = vmul.f32 %v708, %v542
  %711 = vrot.lane.b32.xlu0 %v707, 64
  %v712 = vpop.permute.xlu0 %711
  %v714 = vmul.f32 %v622, %v712
  %v715 = vadd.f32 %v709, %v714
  %v716 = vmul.f32 %v291, %v715
  %v718 = vsel %vm142, %v716, 0
  %720 = vmatprep.subr.mxu0 0.0
  %721 = vmatpush1.msra.mxu0 %v74
  %722 = vmatprep.subr.mxu0 0.0
  %723 = vmatpush1.msra.mxu0 %v75
  %724 = vmatprep.subr.mxu0 0.0
  %725 = vmatpush1.msra.mxu0 %v76
  %726 = vmatprep.subr.mxu0 0.0
  %727 = vmatpush1.msra.mxu0 %v77
  %728 = vmatprep.subr.mxu0 0.0
  %729 = vmatpush1.msra.mxu0 0.0
  %730 = vmatprep.subr.mxu0 0.0
  %731 = vmatpush1.msra.mxu0 0.0
  %732 = vmatprep.subr.mxu0 0.0
  %733 = vmatpush1.msra.mxu0 0.0
  %734 = vmatprep.subr.mxu0 0.0
  %735 = vmatpush1.msra.mxu0 0.0
  %736 = vmatprep.subr.mxu0 0.0
  %737 = vmatpush1.msra.mxu0 0.0
  %738 = vmatprep.subr.mxu0 0.0
  %739 = vmatpush1.msra.mxu0 0.0
  %740 = vmatprep.subr.mxu0 0.0
  %741 = vmatpush1.msra.mxu0 0.0
  %742 = vmatprep.subr.mxu0 0.0
  %743 = vmatpush1.msra.mxu0 0.0
  %744 = vmatprep.subr.mxu0 0.0
  %745 = vmatpush1.msra.mxu0 0.0
  %746 = vmatprep.subr.mxu0 0.0
  %747 = vmatpush1.msra.mxu0 0.0
  %748 = vmatprep.subr.mxu0 0.0
  %749 = vmatpush1.msra.mxu0 0.0
  %750 = vmatprep.subr.mxu0 0.0
  %751 = vmatpush1.msra.mxu0 0.0
  %752 = vmatprep.subr.mxu0 0.0
  %753 = vmatpush1.msra.mxu0 0.0
  %754 = vmatprep.subr.mxu0 0.0
  %755 = vmatpush1.msra.mxu0 0.0
  %756 = vmatprep.subr.mxu0 0.0
  %757 = vmatpush1.msra.mxu0 0.0
  %758 = vmatprep.subr.mxu0 0.0
  %759 = vmatpush1.msra.mxu0 0.0
  %760 = vmatprep.subr.mxu0 0.0
  %761 = vmatpush1.msra.mxu0 0.0
  %762 = vmatprep.subr.mxu0 0.0
  %763 = vmatpush1.msra.mxu0 0.0
  %764 = vmatprep.subr.mxu0 0.0
  %765 = vmatpush1.msra.mxu0 0.0
  %766 = vmatprep.subr.mxu0 0.0
  %767 = vmatpush1.msra.mxu0 0.0
  %768 = vmatprep.subr.mxu0 0.0
  %769 = vmatpush1.msra.mxu0 0.0
  %770 = vmatprep.subr.mxu0 0.0
  %771 = vmatpush1.msra.mxu0 0.0
  %772 = vmatprep.subr.mxu0 0.0
  %773 = vmatpush1.msra.mxu0 0.0
  %774 = vmatprep.subr.mxu0 0.0
  %775 = vmatpush1.msra.mxu0 0.0
  %776 = vmatprep.subr.mxu0 0.0
  %777 = vmatpush1.msra.mxu0 0.0
  %778 = vmatprep.subr.mxu0 0.0
  %779 = vmatpush1.msra.mxu0 0.0
  %780 = vmatprep.subr.mxu0 0.0
  %781 = vmatpush1.msra.mxu0 0.0
  %782 = vmatprep.subr.mxu0 0.0
  %783 = vmatpush1.msra.mxu0 0.0
  %784 = vmatprep.mubr.f32.mxu0 0.0
  %785 = vmatmul.mubr.f32.gmra.mrb[0].mxu0 %v718
  %v786 = vpop.f32.mrb[0].mxu0
  %v787 = vadd.f32 0.0, %v786
  %v788 = vpop.f32.mrb[0].mxu0
  %789 = vdwg.mxu0
  %v790 = vadd.f32 %v509, %v787
  %v791 = vxor.u32 %v790, 2147483648
  %v792 = vmul.f32 %v791, 1.442695
  %v793 = vpow.pop %v792
  %v794 = vadd.f32 %v793, 1.0
  %v795 = vrcp.pop %v794
  %v796 = vmul.f32 1.0, %v795
  %797 = vrot.lane.b32.xlu0 %v716, 32
  %v798 = vpop.permute.xlu0 %797
  %v800 = vmul.f32 %v796, %v798
  %802 = vrot.lane.b32.xlu0 %v800, 96
  %v803 = vpop.permute.xlu0 %802
  %v804 = vsel %vm142, %v803, 0
  %806 = vmatprep.subr.mxu0 0.0
  %807 = vmatpush1.msra.mxu0 %v70
  %808 = vmatprep.subr.mxu0 0.0
  %809 = vmatpush1.msra.mxu0 %v71
  %810 = vmatprep.subr.mxu0 0.0
  %811 = vmatpush1.msra.mxu0 %v72
  %812 = vmatprep.subr.mxu0 0.0
  %813 = vmatpush1.msra.mxu0 %v73
  %814 = vmatprep.subr.mxu0 0.0
  %815 = vmatpush1.msra.mxu0 0.0
  %816 = vmatprep.subr.mxu0 0.0
  %817 = vmatpush1.msra.mxu0 0.0
  %818 = vmatprep.subr.mxu0 0.0
  %819 = vmatpush1.msra.mxu0 0.0
  %820 = vmatprep.subr.mxu0 0.0
  %821 = vmatpush1.msra.mxu0 0.0
  %822 = vmatprep.subr.mxu0 0.0
  %823 = vmatpush1.msra.mxu0 0.0
  %824 = vmatprep.subr.mxu0 0.0
  %825 = vmatpush1.msra.mxu0 0.0
  %826 = vmatprep.subr.mxu0 0.0
  %827 = vmatpush1.msra.mxu0 0.0
  %828 = vmatprep.subr.mxu0 0.0
  %829 = vmatpush1.msra.mxu0 0.0
  %830 = vmatprep.subr.mxu0 0.0
  %831 = vmatpush1.msra.mxu0 0.0
  %832 = vmatprep.subr.mxu0 0.0
  %833 = vmatpush1.msra.mxu0 0.0
  %834 = vmatprep.subr.mxu0 0.0
  %835 = vmatpush1.msra.mxu0 0.0
  %836 = vmatprep.subr.mxu0 0.0
  %837 = vmatpush1.msra.mxu0 0.0
  %838 = vmatprep.subr.mxu0 0.0
  %839 = vmatpush1.msra.mxu0 0.0
  %840 = vmatprep.subr.mxu0 0.0
  %841 = vmatpush1.msra.mxu0 0.0
  %842 = vmatprep.subr.mxu0 0.0
  %843 = vmatpush1.msra.mxu0 0.0
  %844 = vmatprep.subr.mxu0 0.0
  %845 = vmatpush1.msra.mxu0 0.0
  %846 = vmatprep.subr.mxu0 0.0
  %847 = vmatpush1.msra.mxu0 0.0
  %848 = vmatprep.subr.mxu0 0.0
  %849 = vmatpush1.msra.mxu0 0.0
  %850 = vmatprep.subr.mxu0 0.0
  %851 = vmatpush1.msra.mxu0 0.0
  %852 = vmatprep.subr.mxu0 0.0
  %853 = vmatpush1.msra.mxu0 0.0
  %854 = vmatprep.subr.mxu0 0.0
  %855 = vmatpush1.msra.mxu0 0.0
  %856 = vmatprep.subr.mxu0 0.0
  %857 = vmatpush1.msra.mxu0 0.0
  %858 = vmatprep.subr.mxu0 0.0
  %859 = vmatpush1.msra.mxu0 0.0
  %860 = vmatprep.subr.mxu0 0.0
  %861 = vmatpush1.msra.mxu0 0.0
  %862 = vmatprep.subr.mxu0 0.0
  %863 = vmatpush1.msra.mxu0 0.0
  %864 = vmatprep.subr.mxu0 0.0
  %865 = vmatpush1.msra.mxu0 0.0
  %866 = vmatprep.subr.mxu0 0.0
  %867 = vmatpush1.msra.mxu0 0.0
  %868 = vmatprep.subr.mxu0 0.0
  %869 = vmatpush1.msra.mxu0 0.0
  %870 = vmatprep.mubr.f32.mxu0 0.0
  %871 = vmatmul.mubr.f32.gmra.mrb[0].mxu0 %v804
  %v872 = vpop.f32.mrb[0].mxu0
  %v873 = vadd.f32 0.0, %v872
  %v874 = vpop.f32.mrb[0].mxu0
  %875 = vdwg.mxu0
  %877 = vrot.lane.b32.xlu0 %v873, 64
  %v878 = vpop.permute.xlu0 %877
  %v880 = vadd.f32 %v509, %v878
  %v881 = vtanh.pop %v880
  %v882 = vsub.f32 1.0, %v796
  %v883 = vmul.f32 %v882, %v716
  %885 = vrot.lane.b32.xlu0 %v881, 64
  %v886 = vpop.permute.xlu0 %885
  %v888 = vmul.f32 %v796, %v886
  %v889 = vadd.f32 %v883, %v888
  %v890 = vmul.f32 %v293, %v889
  %v892 = vsel %vm142, %v890, 0
  %894 = vmatprep.subr.mxu0 0.0
  %895 = vmatpush1.msra.mxu0 %v74
  %896 = vmatprep.subr.mxu0 0.0
  %897 = vmatpush1.msra.mxu0 %v75
  %898 = vmatprep.subr.mxu0 0.0
  %899 = vmatpush1.msra.mxu0 %v76
  %900 = vmatprep.subr.mxu0 0.0
  %901 = vmatpush1.msra.mxu0 %v77
  %902 = vmatprep.subr.mxu0 0.0
  %903 = vmatpush1.msra.mxu0 0.0
  %904 = vmatprep.subr.mxu0 0.0
  %905 = vmatpush1.msra.mxu0 0.0
  %906 = vmatprep.subr.mxu0 0.0
  %907 = vmatpush1.msra.mxu0 0.0
  %908 = vmatprep.subr.mxu0 0.0
  %909 = vmatpush1.msra.mxu0 0.0
  %910 = vmatprep.subr.mxu0 0.0
  %911 = vmatpush1.msra.mxu0 0.0
  %912 = vmatprep.subr.mxu0 0.0
  %913 = vmatpush1.msra.mxu0 0.0
  %914 = vmatprep.subr.mxu0 0.0
  %915 = vmatpush1.msra.mxu0 0.0
  %916 = vmatprep.subr.mxu0 0.0
  %917 = vmatpush1.msra.mxu0 0.0
  %918 = vmatprep.subr.mxu0 0.0
  %919 = vmatpush1.msra.mxu0 0.0
  %920 = vmatprep.subr.mxu0 0.0
  %921 = vmatpush1.msra.mxu0 0.0
  %922 = vmatprep.subr.mxu0 0.0
  %923 = vmatpush1.msra.mxu0 0.0
  %924 = vmatprep.subr.mxu0 0.0
  %925 = vmatpush1.msra.mxu0 0.0
  %926 = vmatprep.subr.mxu0 0.0
  %927 = vmatpush1.msra.mxu0 0.0
  %928 = vmatprep.subr.mxu0 0.0
  %929 = vmatpush1.msra.mxu0 0.0
  %930 = vmatprep.subr.mxu0 0.0
  %931 = vmatpush1.msra.mxu0 0.0
  %932 = vmatprep.subr.mxu0 0.0
  %933 = vmatpush1.msra.mxu0 0.0
  %934 = vmatprep.subr.mxu0 0.0
  %935 = vmatpush1.msra.mxu0 0.0
  %936 = vmatprep.subr.mxu0 0.0
  %937 = vmatpush1.msra.mxu0 0.0
  %938 = vmatprep.subr.mxu0 0.0
  %939 = vmatpush1.msra.mxu0 0.0
  %940 = vmatprep.subr.mxu0 0.0
  %941 = vmatpush1.msra.mxu0 0.0
  %942 = vmatprep.subr.mxu0 0.0
  %943 = vmatpush1.msra.mxu0 0.0
  %944 = vmatprep.subr.mxu0 0.0
  %945 = vmatpush1.msra.mxu0 0.0
  %946 = vmatprep.subr.mxu0 0.0
  %947 = vmatpush1.msra.mxu0 0.0
  %948 = vmatprep.subr.mxu0 0.0
  %949 = vmatpush1.msra.mxu0 0.0
  %950 = vmatprep.subr.mxu0 0.0
  %951 = vmatpush1.msra.mxu0 0.0
  %952 = vmatprep.subr.mxu0 0.0
  %953 = vmatpush1.msra.mxu0 0.0
  %954 = vmatprep.subr.mxu0 0.0
  %955 = vmatpush1.msra.mxu0 0.0
  %956 = vmatprep.subr.mxu0 0.0
  %957 = vmatpush1.msra.mxu0 0.0
  %958 = vmatprep.mubr.f32.mxu0 0.0
  %959 = vmatmul.mubr.f32.gmra.mrb[0].mxu0 %v892
  %v960 = vpop.f32.mrb[0].mxu0
  %v961 = vadd.f32 0.0, %v960
  %v962 = vpop.f32.mrb[0].mxu0
  %963 = vdwg.mxu0
  %v964 = vadd.f32 %v514, %v961
  %v965 = vxor.u32 %v964, 2147483648
  %v966 = vmul.f32 %v965, 1.442695
  %v967 = vpow.pop %v966
  %v968 = vadd.f32 %v967, 1.0
  %v969 = vrcp.pop %v968
  %v970 = vmul.f32 1.0, %v969
  %971 = vrot.lane.b32.xlu0 %v890, 32
  %v972 = vpop.permute.xlu0 %971
  %v974 = vmul.f32 %v970, %v972
  %976 = vrot.lane.b32.xlu0 %v974, 96
  %v977 = vpop.permute.xlu0 %976
  %v978 = vsel %vm142, %v977, 0
  %980 = vmatprep.subr.mxu0 0.0
  %981 = vmatpush1.msra.mxu0 %v70
  %982 = vmatprep.subr.mxu0 0.0
  %983 = vmatpush1.msra.mxu0 %v71
  %984 = vmatprep.subr.mxu0 0.0
  %985 = vmatpush1.msra.mxu0 %v72
  %986 = vmatprep.subr.mxu0 0.0
  %987 = vmatpush1.msra.mxu0 %v73
  %988 = vmatprep.subr.mxu0 0.0
  %989 = vmatpush1.msra.mxu0 0.0
  %990 = vmatprep.subr.mxu0 0.0
  %991 = vmatpush1.msra.mxu0 0.0
  %992 = vmatprep.subr.mxu0 0.0
  %993 = vmatpush1.msra.mxu0 0.0
  %994 = vmatprep.subr.mxu0 0.0
  %995 = vmatpush1.msra.mxu0 0.0
  %996 = vmatprep.subr.mxu0 0.0
  %997 = vmatpush1.msra.mxu0 0.0
  %998 = vmatprep.subr.mxu0 0.0
  %999 = vmatpush1.msra.mxu0 0.0
  %1000 = vmatprep.subr.mxu0 0.0
  %1001 = vmatpush1.msra.mxu0 0.0
  %1002 = vmatprep.subr.mxu0 0.0
  %1003 = vmatpush1.msra.mxu0 0.0
  %1004 = vmatprep.subr.mxu0 0.0
  %1005 = vmatpush1.msra.mxu0 0.0
  %1006 = vmatprep.subr.mxu0 0.0
  %1007 = vmatpush1.msra.mxu0 0.0
  %1008 = vmatprep.subr.mxu0 0.0
  %1009 = vmatpush1.msra.mxu0 0.0
  %1010 = vmatprep.subr.mxu0 0.0
  %1011 = vmatpush1.msra.mxu0 0.0
  %1012 = vmatprep.subr.mxu0 0.0
  %1013 = vmatpush1.msra.mxu0 0.0
  %1014 = vmatprep.subr.mxu0 0.0
  %1015 = vmatpush1.msra.mxu0 0.0
  %1016 = vmatprep.subr.mxu0 0.0
  %1017 = vmatpush1.msra.mxu0 0.0
  %1018 = vmatprep.subr.mxu0 0.0
  %1019 = vmatpush1.msra.mxu0 0.0
  %1020 = vmatprep.subr.mxu0 0.0
  %1021 = vmatpush1.msra.mxu0 0.0
  %1022 = vmatprep.subr.mxu0 0.0
  %1023 = vmatpush1.msra.mxu0 0.0
  %1024 = vmatprep.subr.mxu0 0.0
  %1025 = vmatpush1.msra.mxu0 0.0
  %1026 = vmatprep.subr.mxu0 0.0
  %1027 = vmatpush1.msra.mxu0 0.0
  %1028 = vmatprep.subr.mxu0 0.0
  %1029 = vmatpush1.msra.mxu0 0.0
  %1030 = vmatprep.subr.mxu0 0.0
  %1031 = vmatpush1.msra.mxu0 0.0
  %1032 = vmatprep.subr.mxu0 0.0
  %1033 = vmatpush1.msra.mxu0 0.0
  %1034 = vmatprep.subr.mxu0 0.0
  %1035 = vmatpush1.msra.mxu0 0.0
  %1036 = vmatprep.subr.mxu0 0.0
  %1037 = vmatpush1.msra.mxu0 0.0
  %1038 = vmatprep.subr.mxu0 0.0
  %1039 = vmatpush1.msra.mxu0 0.0
  %1040 = vmatprep.subr.mxu0 0.0
  %1041 = vmatpush1.msra.mxu0 0.0
  %1042 = vmatprep.subr.mxu0 0.0
  %1043 = vmatpush1.msra.mxu0 0.0
  %1044 = vmatprep.mubr.f32.mxu0 0.0
  %1045 = vmatmul.mubr.f32.gmra.mrb[0].mxu0 %v978
  %v1046 = vpop.f32.mrb[0].mxu0
  %v1047 = vadd.f32 0.0, %v1046
  %v1048 = vpop.f32.mrb[0].mxu0
  %1049 = vdwg.mxu0
  %1051 = vrot.lane.b32.xlu0 %v1047, 64
  %v1052 = vpop.permute.xlu0 %1051
  %v1054 = vadd.f32 %v514, %v1052
  %v1055 = vtanh.pop %v1054
  %v1056 = vsub.f32 1.0, %v970
  %v1057 = vmul.f32 %v1056, %v890
  %1059 = vrot.lane.b32.xlu0 %v1055, 64
  %v1060 = vpop.permute.xlu0 %1059
  %v1062 = vmul.f32 %v970, %v1060
  %v1063 = vadd.f32 %v1057, %v1062
  %v1064 = vmul.f32 %v295, %v1063
  %v1066 = vsel %vm142, %v1064, 0
  %1068 = vmatprep.subr.mxu0 0.0
  %1069 = vmatpush1.msra.mxu0 %v74
  %1070 = vmatprep.subr.mxu0 0.0
  %1071 = vmatpush1.msra.mxu0 %v75
  %1072 = vmatprep.subr.mxu0 0.0
  %1073 = vmatpush1.msra.mxu0 %v76
  %1074 = vmatprep.subr.mxu0 0.0
  %1075 = vmatpush1.msra.mxu0 %v77
  %1076 = vmatprep.subr.mxu0 0.0
  %1077 = vmatpush1.msra.mxu0 0.0
  %1078 = vmatprep.subr.mxu0 0.0
  %1079 = vmatpush1.msra.mxu0 0.0
  %1080 = vmatprep.subr.mxu0 0.0
  %1081 = vmatpush1.msra.mxu0 0.0
  %1082 = vmatprep.subr.mxu0 0.0
  %1083 = vmatpush1.msra.mxu0 0.0
  %1084 = vmatprep.subr.mxu0 0.0
  %1085 = vmatpush1.msra.mxu0 0.0
  %1086 = vmatprep.subr.mxu0 0.0
  %1087 = vmatpush1.msra.mxu0 0.0
  %1088 = vmatprep.subr.mxu0 0.0
  %1089 = vmatpush1.msra.mxu0 0.0
  %1090 = vmatprep.subr.mxu0 0.0
  %1091 = vmatpush1.msra.mxu0 0.0
  %1092 = vmatprep.subr.mxu0 0.0
  %1093 = vmatpush1.msra.mxu0 0.0
  %1094 = vmatprep.subr.mxu0 0.0
  %1095 = vmatpush1.msra.mxu0 0.0
  %1096 = vmatprep.subr.mxu0 0.0
  %1097 = vmatpush1.msra.mxu0 0.0
  %1098 = vmatprep.subr.mxu0 0.0
  %1099 = vmatpush1.msra.mxu0 0.0
  %1100 = vmatprep.subr.mxu0 0.0
  %1101 = vmatpush1.msra.mxu0 0.0
  %1102 = vmatprep.subr.mxu0 0.0
  %1103 = vmatpush1.msra.mxu0 0.0
  %1104 = vmatprep.subr.mxu0 0.0
  %1105 = vmatpush1.msra.mxu0 0.0
  %1106 = vmatprep.subr.mxu0 0.0
  %1107 = vmatpush1.msra.mxu0 0.0
  %1108 = vmatprep.subr.mxu0 0.0
  %1109 = vmatpush1.msra.mxu0 0.0
  %1110 = vmatprep.subr.mxu0 0.0
  %1111 = vmatpush1.msra.mxu0 0.0
  %1112 = vmatprep.subr.mxu0 0.0
  %1113 = vmatpush1.msra.mxu0 0.0
  %1114 = vmatprep.subr.mxu0 0.0
  %1115 = vmatpush1.msra.mxu0 0.0
  %1116 = vmatprep.subr.mxu0 0.0
  %1117 = vmatpush1.msra.mxu0 0.0
  %1118 = vmatprep.subr.mxu0 0.0
  %1119 = vmatpush1.msra.mxu0 0.0
  %1120 = vmatprep.subr.mxu0 0.0
  %1121 = vmatpush1.msra.mxu0 0.0
  %1122 = vmatprep.subr.mxu0 0.0
  %1123 = vmatpush1.msra.mxu0 0.0
  %1124 = vmatprep.subr.mxu0 0.0
  %1125 = vmatpush1.msra.mxu0 0.0
  %1126 = vmatprep.subr.mxu0 0.0
  %1127 = vmatpush1.msra.mxu0 0.0
  %1128 = vmatprep.subr.mxu0 0.0
  %1129 = vmatpush1.msra.mxu0 0.0
  %1130 = vmatprep.subr.mxu0 0.0
  %1131 = vmatpush1.msra.mxu0 0.0
  %1132 = vmatprep.mubr.f32.mxu0 0.0
  %1133 = vmatmul.mubr.f32.gmra.mrb[0].mxu0 %v1066
  %v1134 = vpop.f32.mrb[0].mxu0
  %v1135 = vadd.f32 0.0, %v1134
  %v1136 = vpop.f32.mrb[0].mxu0
  %1137 = vdwg.mxu0
  %v1138 = vadd.f32 %v519, %v1135
  %v1139 = vxor.u32 %v1138, 2147483648
  %v1140 = vmul.f32 %v1139, 1.442695
  %v1141 = vpow.pop %v1140
  %v1142 = vadd.f32 %v1141, 1.0
  %v1143 = vrcp.pop %v1142
  %v1144 = vmul.f32 1.0, %v1143
  %1145 = vrot.lane.b32.xlu0 %v1064, 32
  %v1146 = vpop.permute.xlu0 %1145
  %v1148 = vmul.f32 %v1144, %v1146
  %1150 = vrot.lane.b32.xlu0 %v1148, 96
  %v1151 = vpop.permute.xlu0 %1150
  %v1152 = vsel %vm142, %v1151, 0
  %1154 = vmatprep.subr.mxu0 0.0
  %1155 = vmatpush1.msra.mxu0 %v70
  %1156 = vmatprep.subr.mxu0 0.0
  %1157 = vmatpush1.msra.mxu0 %v71
  %1158 = vmatprep.subr.mxu0 0.0
  %1159 = vmatpush1.msra.mxu0 %v72
  %1160 = vmatprep.subr.mxu0 0.0
  %1161 = vmatpush1.msra.mxu0 %v73
  %1162 = vmatprep.subr.mxu0 0.0
  %1163 = vmatpush1.msra.mxu0 0.0
  %1164 = vmatprep.subr.mxu0 0.0
  %1165 = vmatpush1.msra.mxu0 0.0
  %1166 = vmatprep.subr.mxu0 0.0
  %1167 = vmatpush1.msra.mxu0 0.0
  %1168 = vmatprep.subr.mxu0 0.0
  %1169 = vmatpush1.msra.mxu0 0.0
  %1170 = vmatprep.subr.mxu0 0.0
  %1171 = vmatpush1.msra.mxu0 0.0
  %1172 = vmatprep.subr.mxu0 0.0
  %1173 = vmatpush1.msra.mxu0 0.0
  %1174 = vmatprep.subr.mxu0 0.0
  %1175 = vmatpush1.msra.mxu0 0.0
  %1176 = vmatprep.subr.mxu0 0.0
  %1177 = vmatpush1.msra.mxu0 0.0
  %1178 = vmatprep.subr.mxu0 0.0
  %1179 = vmatpush1.msra.mxu0 0.0
  %1180 = vmatprep.subr.mxu0 0.0
  %1181 = vmatpush1.msra.mxu0 0.0
  %1182 = vmatprep.subr.mxu0 0.0
  %1183 = vmatpush1.msra.mxu0 0.0
  %1184 = vmatprep.subr.mxu0 0.0
  %1185 = vmatpush1.msra.mxu0 0.0
  %1186 = vmatprep.subr.mxu0 0.0
  %1187 = vmatpush1.msra.mxu0 0.0
  %1188 = vmatprep.subr.mxu0 0.0
  %1189 = vmatpush1.msra.mxu0 0.0
  %1190 = vmatprep.subr.mxu0 0.0
  %1191 = vmatpush1.msra.mxu0 0.0
  %1192 = vmatprep.subr.mxu0 0.0
  %1193 = vmatpush1.msra.mxu0 0.0
  %1194 = vmatprep.subr.mxu0 0.0
  %1195 = vmatpush1.msra.mxu0 0.0
  %1196 = vmatprep.subr.mxu0 0.0
  %1197 = vmatpush1.msra.mxu0 0.0
  %1198 = vmatprep.subr.mxu0 0.0
  %1199 = vmatpush1.msra.mxu0 0.0
  %1200 = vmatprep.subr.mxu0 0.0
  %1201 = vmatpush1.msra.mxu0 0.0
  %1202 = vmatprep.subr.mxu0 0.0
  %1203 = vmatpush1.msra.mxu0 0.0
  %1204 = vmatprep.subr.mxu0 0.0
  %1205 = vmatpush1.msra.mxu0 0.0
  %1206 = vmatprep.subr.mxu0 0.0
  %1207 = vmatpush1.msra.mxu0 0.0
  %1208 = vmatprep.subr.mxu0 0.0
  %1209 = vmatpush1.msra.mxu0 0.0
  %1210 = vmatprep.subr.mxu0 0.0
  %1211 = vmatpush1.msra.mxu0 0.0
  %1212 = vmatprep.subr.mxu0 0.0
  %1213 = vmatpush1.msra.mxu0 0.0
  %1214 = vmatprep.subr.mxu0 0.0
  %1215 = vmatpush1.msra.mxu0 0.0
  %1216 = vmatprep.subr.mxu0 0.0
  %1217 = vmatpush1.msra.mxu0 0.0
  %1218 = vmatprep.mubr.f32.mxu0 0.0
  %1219 = vmatmul.mubr.f32.gmra.mrb[0].mxu0 %v1152
  %v1220 = vpop.f32.mrb[0].mxu0
  %v1221 = vadd.f32 0.0, %v1220
  %v1222 = vpop.f32.mrb[0].mxu0
  %1223 = vdwg.mxu0
  %1225 = vrot.lane.b32.xlu0 %v1221, 64
  %v1226 = vpop.permute.xlu0 %1225
  %v1228 = vadd.f32 %v519, %v1226
  %v1229 = vtanh.pop %v1228
  %v1230 = vsub.f32 1.0, %v1144
  %v1231 = vmul.f32 %v1230, %v1064
  %1233 = vrot.lane.b32.xlu0 %v1229, 64
  %v1234 = vpop.permute.xlu0 %1233
  %v1236 = vmul.f32 %v1144, %v1234
  %v1237 = vadd.f32 %v1231, %v1236
  %v1238 = vmul.f32 %v297, %v1237
  %v1240 = vsel %vm142, %v1238, 0
  %1242 = vmatprep.subr.mxu0 0.0
  %1243 = vmatpush1.msra.mxu0 %v74
  %1244 = vmatprep.subr.mxu0 0.0
  %1245 = vmatpush1.msra.mxu0 %v75
  %1246 = vmatprep.subr.mxu0 0.0
  %1247 = vmatpush1.msra.mxu0 %v76
  %1248 = vmatprep.subr.mxu0 0.0
  %1249 = vmatpush1.msra.mxu0 %v77
  %1250 = vmatprep.subr.mxu0 0.0
  %1251 = vmatpush1.msra.mxu0 0.0
  %1252 = vmatprep.subr.mxu0 0.0
  %1253 = vmatpush1.msra.mxu0 0.0
  %1254 = vmatprep.subr.mxu0 0.0
  %1255 = vmatpush1.msra.mxu0 0.0
  %1256 = vmatprep.subr.mxu0 0.0
  %1257 = vmatpush1.msra.mxu0 0.0
  %1258 = vmatprep.subr.mxu0 0.0
  %1259 = vmatpush1.msra.mxu0 0.0
  %1260 = vmatprep.subr.mxu0 0.0
  %1261 = vmatpush1.msra.mxu0 0.0
  %1262 = vmatprep.subr.mxu0 0.0
  %1263 = vmatpush1.msra.mxu0 0.0
  %1264 = vmatprep.subr.mxu0 0.0
  %1265 = vmatpush1.msra.mxu0 0.0
  %1266 = vmatprep.subr.mxu0 0.0
  %1267 = vmatpush1.msra.mxu0 0.0
  %1268 = vmatprep.subr.mxu0 0.0
  %1269 = vmatpush1.msra.mxu0 0.0
  %1270 = vmatprep.subr.mxu0 0.0
  %1271 = vmatpush1.msra.mxu0 0.0
  %1272 = vmatprep.subr.mxu0 0.0
  %1273 = vmatpush1.msra.mxu0 0.0
  %1274 = vmatprep.subr.mxu0 0.0
  %1275 = vmatpush1.msra.mxu0 0.0
  %1276 = vmatprep.subr.mxu0 0.0
  %1277 = vmatpush1.msra.mxu0 0.0
  %1278 = vmatprep.subr.mxu0 0.0
  %1279 = vmatpush1.msra.mxu0 0.0
  %1280 = vmatprep.subr.mxu0 0.0
  %1281 = vmatpush1.msra.mxu0 0.0
  %1282 = vmatprep.subr.mxu0 0.0
  %1283 = vmatpush1.msra.mxu0 0.0
  %1284 = vmatprep.subr.mxu0 0.0
  %1285 = vmatpush1.msra.mxu0 0.0
  %1286 = vmatprep.subr.mxu0 0.0
  %1287 = vmatpush1.msra.mxu0 0.0
  %1288 = vmatprep.subr.mxu0 0.0
  %1289 = vmatpush1.msra.mxu0 0.0
  %1290 = vmatprep.subr.mxu0 0.0
  %1291 = vmatpush1.msra.mxu0 0.0
  %1292 = vmatprep.subr.mxu0 0.0
  %1293 = vmatpush1.msra.mxu0 0.0
  %1294 = vmatprep.subr.mxu0 0.0
  %1295 = vmatpush1.msra.mxu0 0.0
  %1296 = vmatprep.subr.mxu0 0.0
  %1297 = vmatpush1.msra.mxu0 0.0
  %1298 = vmatprep.subr.mxu0 0.0
  %1299 = vmatpush1.msra.mxu0 0.0
  %1300 = vmatprep.subr.mxu0 0.0
  %1301 = vmatpush1.msra.mxu0 0.0
  %1302 = vmatprep.subr.mxu0 0.0
  %1303 = vmatpush1.msra.mxu0 0.0
  %1304 = vmatprep.subr.mxu0 0.0
  %1305 = vmatpush1.msra.mxu0 0.0
  %1306 = vmatprep.mubr.f32.mxu0 0.0
  %1307 = vmatmul.mubr.f32.gmra.mrb[0].mxu0 %v1240
  %v1308 = vpop.f32.mrb[0].mxu0
  %v1309 = vadd.f32 0.0, %v1308
  %v1310 = vpop.f32.mrb[0].mxu0
  %1311 = vdwg.mxu0
  %v1312 = vadd.f32 %v524, %v1309
  %v1313 = vxor.u32 %v1312, 2147483648
  %v1314 = vmul.f32 %v1313, 1.442695
  %v1315 = vpow.pop %v1314
  %v1316 = vadd.f32 %v1315, 1.0
  %v1317 = vrcp.pop %v1316
  %v1318 = vmul.f32 1.0, %v1317
  %1319 = vrot.lane.b32.xlu0 %v1238, 32
  %v1320 = vpop.permute.xlu0 %1319
  %v1322 = vmul.f32 %v1318, %v1320
  %1324 = vrot.lane.b32.xlu0 %v1322, 96
  %v1325 = vpop.permute.xlu0 %1324
  %v1326 = vsel %vm142, %v1325, 0
  %1328 = vmatprep.subr.mxu0 0.0
  %1329 = vmatpush1.msra.mxu0 %v70
  %1330 = vmatprep.subr.mxu0 0.0
  %1331 = vmatpush1.msra.mxu0 %v71
  %1332 = vmatprep.subr.mxu0 0.0
  %1333 = vmatpush1.msra.mxu0 %v72
  %1334 = vmatprep.subr.mxu0 0.0
  %1335 = vmatpush1.msra.mxu0 %v73
  %1336 = vmatprep.subr.mxu0 0.0
  %1337 = vmatpush1.msra.mxu0 0.0
  %1338 = vmatprep.subr.mxu0 0.0
  %1339 = vmatpush1.msra.mxu0 0.0
  %1340 = vmatprep.subr.mxu0 0.0
  %1341 = vmatpush1.msra.mxu0 0.0
  %1342 = vmatprep.subr.mxu0 0.0
  %1343 = vmatpush1.msra.mxu0 0.0
  %1344 = vmatprep.subr.mxu0 0.0
  %1345 = vmatpush1.msra.mxu0 0.0
  %1346 = vmatprep.subr.mxu0 0.0
  %1347 = vmatpush1.msra.mxu0 0.0
  %1348 = vmatprep.subr.mxu0 0.0
  %1349 = vmatpush1.msra.mxu0 0.0
  %1350 = vmatprep.subr.mxu0 0.0
  %1351 = vmatpush1.msra.mxu0 0.0
  %1352 = vmatprep.subr.mxu0 0.0
  %1353 = vmatpush1.msra.mxu0 0.0
  %1354 = vmatprep.subr.mxu0 0.0
  %1355 = vmatpush1.msra.mxu0 0.0
  %1356 = vmatprep.subr.mxu0 0.0
  %1357 = vmatpush1.msra.mxu0 0.0
  %1358 = vmatprep.subr.mxu0 0.0
  %1359 = vmatpush1.msra.mxu0 0.0
  %1360 = vmatprep.subr.mxu0 0.0
  %1361 = vmatpush1.msra.mxu0 0.0
  %1362 = vmatprep.subr.mxu0 0.0
  %1363 = vmatpush1.msra.mxu0 0.0
  %1364 = vmatprep.subr.mxu0 0.0
  %1365 = vmatpush1.msra.mxu0 0.0
  %1366 = vmatprep.subr.mxu0 0.0
  %1367 = vmatpush1.msra.mxu0 0.0
  %1368 = vmatprep.subr.mxu0 0.0
  %1369 = vmatpush1.msra.mxu0 0.0
  %1370 = vmatprep.subr.mxu0 0.0
  %1371 = vmatpush1.msra.mxu0 0.0
  %1372 = vmatprep.subr.mxu0 0.0
  %1373 = vmatpush1.msra.mxu0 0.0
  %1374 = vmatprep.subr.mxu0 0.0
  %1375 = vmatpush1.msra.mxu0 0.0
  %1376 = vmatprep.subr.mxu0 0.0
  %1377 = vmatpush1.msra.mxu0 0.0
  %1378 = vmatprep.subr.mxu0 0.0
  %1379 = vmatpush1.msra.mxu0 0.0
  %1380 = vmatprep.subr.mxu0 0.0
  %1381 = vmatpush1.msra.mxu0 0.0
  %1382 = vmatprep.subr.mxu0 0.0
  %1383 = vmatpush1.msra.mxu0 0.0
  %1384 = vmatprep.subr.mxu0 0.0
  %1385 = vmatpush1.msra.mxu0 0.0
  %1386 = vmatprep.subr.mxu0 0.0
  %1387 = vmatpush1.msra.mxu0 0.0
  %1388 = vmatprep.subr.mxu0 0.0
  %1389 = vmatpush1.msra.mxu0 0.0
  %1390 = vmatprep.subr.mxu0 0.0
  %1391 = vmatpush1.msra.mxu0 0.0
  %1392 = vmatprep.mubr.f32.mxu0 0.0
  %1393 = vmatmul.mubr.f32.gmra.mrb[0].mxu0 %v1326
  %v1394 = vpop.f32.mrb[0].mxu0
  %v1395 = vadd.f32 0.0, %v1394
  %v1396 = vpop.f32.mrb[0].mxu0
  %1397 = vdwg.mxu0
  %1399 = vrot.lane.b32.xlu0 %v1395, 64
  %v1400 = vpop.permute.xlu0 %1399
  %v1402 = vadd.f32 %v524, %v1400
  %v1403 = vtanh.pop %v1402
  %v1404 = vsub.f32 1.0, %v1318
  %v1405 = vmul.f32 %v1404, %v1238
  %1407 = vrot.lane.b32.xlu0 %v1403, 64
  %v1408 = vpop.permute.xlu0 %1407
  %v1410 = vmul.f32 %v1318, %v1408
  %v1411 = vadd.f32 %v1405, %v1410
  %v1412 = vmul.f32 %v299, %v1411
  %v1414 = vsel %vm142, %v1412, 0
  %1416 = vmatprep.subr.mxu0 0.0
  %1417 = vmatpush1.msra.mxu0 %v74
  %1418 = vmatprep.subr.mxu0 0.0
  %1419 = vmatpush1.msra.mxu0 %v75
  %1420 = vmatprep.subr.mxu0 0.0
  %1421 = vmatpush1.msra.mxu0 %v76
  %1422 = vmatprep.subr.mxu0 0.0
  %1423 = vmatpush1.msra.mxu0 %v77
  %1424 = vmatprep.subr.mxu0 0.0
  %1425 = vmatpush1.msra.mxu0 0.0
  %1426 = vmatprep.subr.mxu0 0.0
  %1427 = vmatpush1.msra.mxu0 0.0
  %1428 = vmatprep.subr.mxu0 0.0
  %1429 = vmatpush1.msra.mxu0 0.0
  %1430 = vmatprep.subr.mxu0 0.0
  %1431 = vmatpush1.msra.mxu0 0.0
  %1432 = vmatprep.subr.mxu0 0.0
  %1433 = vmatpush1.msra.mxu0 0.0
  %1434 = vmatprep.subr.mxu0 0.0
  %1435 = vmatpush1.msra.mxu0 0.0
  %1436 = vmatprep.subr.mxu0 0.0
  %1437 = vmatpush1.msra.mxu0 0.0
  %1438 = vmatprep.subr.mxu0 0.0
  %1439 = vmatpush1.msra.mxu0 0.0
  %1440 = vmatprep.subr.mxu0 0.0
  %1441 = vmatpush1.msra.mxu0 0.0
  %1442 = vmatprep.subr.mxu0 0.0
  %1443 = vmatpush1.msra.mxu0 0.0
  %1444 = vmatprep.subr.mxu0 0.0
  %1445 = vmatpush1.msra.mxu0 0.0
  %1446 = vmatprep.subr.mxu0 0.0
  %1447 = vmatpush1.msra.mxu0 0.0
  %1448 = vmatprep.subr.mxu0 0.0
  %1449 = vmatpush1.msra.mxu0 0.0
  %1450 = vmatprep.subr.mxu0 0.0
  %1451 = vmatpush1.msra.mxu0 0.0
  %1452 = vmatprep.subr.mxu0 0.0
  %1453 = vmatpush1.msra.mxu0 0.0
  %1454 = vmatprep.subr.mxu0 0.0
  %1455 = vmatpush1.msra.mxu0 0.0
  %1456 = vmatprep.subr.mxu0 0.0
  %1457 = vmatpush1.msra.mxu0 0.0
  %1458 = vmatprep.subr.mxu0 0.0
  %1459 = vmatpush1.msra.mxu0 0.0
  %1460 = vmatprep.subr.mxu0 0.0
  %1461 = vmatpush1.msra.mxu0 0.0
  %1462 = vmatprep.subr.mxu0 0.0
  %1463 = vmatpush1.msra.mxu0 0.0
  %1464 = vmatprep.subr.mxu0 0.0
  %1465 = vmatpush1.msra.mxu0 0.0
  %1466 = vmatprep.subr.mxu0 0.0
  %1467 = vmatpush1.msra.mxu0 0.0
  %1468 = vmatprep.subr.mxu0 0.0
  %1469 = vmatpush1.msra.mxu0 0.0
  %1470 = vmatprep.subr.mxu0 0.0
  %1471 = vmatpush1.msra.mxu0 0.0
  %1472 = vmatprep.subr.mxu0 0.0
  %1473 = vmatpush1.msra.mxu0 0.0
  %1474 = vmatprep.subr.mxu0 0.0
  %1475 = vmatpush1.msra.mxu0 0.0
  %1476 = vmatprep.subr.mxu0 0.0
  %1477 = vmatpush1.msra.mxu0 0.0
  %1478 = vmatprep.subr.mxu0 0.0
  %1479 = vmatpush1.msra.mxu0 0.0
  %1480 = vmatprep.mubr.f32.mxu0 0.0
  %1481 = vmatmul.mubr.f32.gmra.mrb[0].mxu0 %v1414
  %v1482 = vpop.f32.mrb[0].mxu0
  %v1483 = vadd.f32 0.0, %v1482
  %v1484 = vpop.f32.mrb[0].mxu0
  %1485 = vdwg.mxu0
  %v1486 = vadd.f32 %v529, %v1483
  %v1487 = vxor.u32 %v1486, 2147483648
  %v1488 = vmul.f32 %v1487, 1.442695
  %v1489 = vpow.pop %v1488
  %v1490 = vadd.f32 %v1489, 1.0
  %v1491 = vrcp.pop %v1490
  %v1492 = vmul.f32 1.0, %v1491
  %1493 = vrot.lane.b32.xlu0 %v1412, 32
  %v1494 = vpop.permute.xlu0 %1493
  %v1496 = vmul.f32 %v1492, %v1494
  %1498 = vrot.lane.b32.xlu0 %v1496, 96
  %v1499 = vpop.permute.xlu0 %1498
  %v1500 = vsel %vm142, %v1499, 0
  %1502 = vmatprep.subr.mxu0 0.0
  %1503 = vmatpush1.msra.mxu0 %v70
  %1504 = vmatprep.subr.mxu0 0.0
  %1505 = vmatpush1.msra.mxu0 %v71
  %1506 = vmatprep.subr.mxu0 0.0
  %1507 = vmatpush1.msra.mxu0 %v72
  %1508 = vmatprep.subr.mxu0 0.0
  %1509 = vmatpush1.msra.mxu0 %v73
  %1510 = vmatprep.subr.mxu0 0.0
  %1511 = vmatpush1.msra.mxu0 0.0
  %1512 = vmatprep.subr.mxu0 0.0
  %1513 = vmatpush1.msra.mxu0 0.0
  %1514 = vmatprep.subr.mxu0 0.0
  %1515 = vmatpush1.msra.mxu0 0.0
  %1516 = vmatprep.subr.mxu0 0.0
  %1517 = vmatpush1.msra.mxu0 0.0
  %1518 = vmatprep.subr.mxu0 0.0
  %1519 = vmatpush1.msra.mxu0 0.0
  %1520 = vmatprep.subr.mxu0 0.0
  %1521 = vmatpush1.msra.mxu0 0.0
  %1522 = vmatprep.subr.mxu0 0.0
  %1523 = vmatpush1.msra.mxu0 0.0
  %1524 = vmatprep.subr.mxu0 0.0
  %1525 = vmatpush1.msra.mxu0 0.0
  %1526 = vmatprep.subr.mxu0 0.0
  %1527 = vmatpush1.msra.mxu0 0.0
  %1528 = vmatprep.subr.mxu0 0.0
  %1529 = vmatpush1.msra.mxu0 0.0
  %1530 = vmatprep.subr.mxu0 0.0
  %1531 = vmatpush1.msra.mxu0 0.0
  %1532 = vmatprep.subr.mxu0 0.0
  %1533 = vmatpush1.msra.mxu0 0.0
  %1534 = vmatprep.subr.mxu0 0.0
  %1535 = vmatpush1.msra.mxu0 0.0
  %1536 = vmatprep.subr.mxu0 0.0
  %1537 = vmatpush1.msra.mxu0 0.0
  %1538 = vmatprep.subr.mxu0 0.0
  %1539 = vmatpush1.msra.mxu0 0.0
  %1540 = vmatprep.subr.mxu0 0.0
  %1541 = vmatpush1.msra.mxu0 0.0
  %1542 = vmatprep.subr.mxu0 0.0
  %1543 = vmatpush1.msra.mxu0 0.0
  %1544 = vmatprep.subr.mxu0 0.0
  %1545 = vmatpush1.msra.mxu0 0.0
  %1546 = vmatprep.subr.mxu0 0.0
  %1547 = vmatpush1.msra.mxu0 0.0
  %1548 = vmatprep.subr.mxu0 0.0
  %1549 = vmatpush1.msra.mxu0 0.0
  %1550 = vmatprep.subr.mxu0 0.0
  %1551 = vmatpush1.msra.mxu0 0.0
  %1552 = vmatprep.subr.mxu0 0.0
  %1553 = vmatpush1.msra.mxu0 0.0
  %1554 = vmatprep.subr.mxu0 0.0
  %1555 = vmatpush1.msra.mxu0 0.0
  %1556 = vmatprep.subr.mxu0 0.0
  %1557 = vmatpush1.msra.mxu0 0.0
  %1558 = vmatprep.subr.mxu0 0.0
  %1559 = vmatpush1.msra.mxu0 0.0
  %1560 = vmatprep.subr.mxu0 0.0
  %1561 = vmatpush1.msra.mxu0 0.0
  %1562 = vmatprep.subr.mxu0 0.0
  %1563 = vmatpush1.msra.mxu0 0.0
  %1564 = vmatprep.subr.mxu0 0.0
  %1565 = vmatpush1.msra.mxu0 0.0
  %1566 = vmatprep.mubr.f32.mxu0 0.0
  %1567 = vmatmul.mubr.f32.gmra.mrb[0].mxu0 %v1500
  %v1568 = vpop.f32.mrb[0].mxu0
  %v1569 = vadd.f32 0.0, %v1568
  %v1570 = vpop.f32.mrb[0].mxu0
  %1571 = vdwg.mxu0
  %1573 = vrot.lane.b32.xlu0 %v1569, 64
  %v1574 = vpop.permute.xlu0 %1573
  %v1576 = vadd.f32 %v529, %v1574
  %v1577 = vtanh.pop %v1576
  %v1578 = vsub.f32 1.0, %v1492
  %v1579 = vmul.f32 %v1578, %v1412
  %1581 = vrot.lane.b32.xlu0 %v1577, 64
  %v1582 = vpop.permute.xlu0 %1581
  %v1584 = vmul.f32 %v1492, %v1582
  %v1585 = vadd.f32 %v1579, %v1584
  %v1586 = vmul.f32 %v301, %v1585
  %v1588 = vsel %vm142, %v1586, 0
  %1590 = vmatprep.subr.mxu0 0.0
  %1591 = vmatpush1.msra.mxu0 %v74
  %1592 = vmatprep.subr.mxu0 0.0
  %1593 = vmatpush1.msra.mxu0 %v75
  %1594 = vmatprep.subr.mxu0 0.0
  %1595 = vmatpush1.msra.mxu0 %v76
  %1596 = vmatprep.subr.mxu0 0.0
  %1597 = vmatpush1.msra.mxu0 %v77
  %1598 = vmatprep.subr.mxu0 0.0
  %1599 = vmatpush1.msra.mxu0 0.0
  %1600 = vmatprep.subr.mxu0 0.0
  %1601 = vmatpush1.msra.mxu0 0.0
  %1602 = vmatprep.subr.mxu0 0.0
  %1603 = vmatpush1.msra.mxu0 0.0
  %1604 = vmatprep.subr.mxu0 0.0
  %1605 = vmatpush1.msra.mxu0 0.0
  %1606 = vmatprep.subr.mxu0 0.0
  %1607 = vmatpush1.msra.mxu0 0.0
  %1608 = vmatprep.subr.mxu0 0.0
  %1609 = vmatpush1.msra.mxu0 0.0
  %1610 = vmatprep.subr.mxu0 0.0
  %1611 = vmatpush1.msra.mxu0 0.0
  %1612 = vmatprep.subr.mxu0 0.0
  %1613 = vmatpush1.msra.mxu0 0.0
  %1614 = vmatprep.subr.mxu0 0.0
  %1615 = vmatpush1.msra.mxu0 0.0
  %1616 = vmatprep.subr.mxu0 0.0
  %1617 = vmatpush1.msra.mxu0 0.0
  %1618 = vmatprep.subr.mxu0 0.0
  %1619 = vmatpush1.msra.mxu0 0.0
  %1620 = vmatprep.subr.mxu0 0.0
  %1621 = vmatpush1.msra.mxu0 0.0
  %1622 = vmatprep.subr.mxu0 0.0
  %1623 = vmatpush1.msra.mxu0 0.0
  %1624 = vmatprep.subr.mxu0 0.0
  %1625 = vmatpush1.msra.mxu0 0.0
  %1626 = vmatprep.subr.mxu0 0.0
  %1627 = vmatpush1.msra.mxu0 0.0
  %1628 = vmatprep.subr.mxu0 0.0
  %1629 = vmatpush1.msra.mxu0 0.0
  %1630 = vmatprep.subr.mxu0 0.0
  %1631 = vmatpush1.msra.mxu0 0.0
  %1632 = vmatprep.subr.mxu0 0.0
  %1633 = vmatpush1.msra.mxu0 0.0
  %1634 = vmatprep.subr.mxu0 0.0
  %1635 = vmatpush1.msra.mxu0 0.0
  %1636 = vmatprep.subr.mxu0 0.0
  %1637 = vmatpush1.msra.mxu0 0.0
  %1638 = vmatprep.subr.mxu0 0.0
  %1639 = vmatpush1.msra.mxu0 0.0
  %1640 = vmatprep.subr.mxu0 0.0
  %1641 = vmatpush1.msra.mxu0 0.0
  %1642 = vmatprep.subr.mxu0 0.0
  %1643 = vmatpush1.msra.mxu0 0.0
  %1644 = vmatprep.subr.mxu0 0.0
  %1645 = vmatpush1.msra.mxu0 0.0
  %1646 = vmatprep.subr.mxu0 0.0
  %1647 = vmatpush1.msra.mxu0 0.0
  %1648 = vmatprep.subr.mxu0 0.0
  %1649 = vmatpush1.msra.mxu0 0.0
  %1650 = vmatprep.subr.mxu0 0.0
  %1651 = vmatpush1.msra.mxu0 0.0
  %1652 = vmatprep.subr.mxu0 0.0
  %1653 = vmatpush1.msra.mxu0 0.0
  %1654 = vmatprep.mubr.f32.mxu0 0.0
  %1655 = vmatmul.mubr.f32.gmra.mrb[0].mxu0 %v1588
  %v1656 = vpop.f32.mrb[0].mxu0
  %v1657 = vadd.f32 0.0, %v1656
  %v1658 = vpop.f32.mrb[0].mxu0
  %1659 = vdwg.mxu0
  %v1660 = vadd.f32 %v534, %v1657
  %v1661 = vxor.u32 %v1660, 2147483648
  %v1662 = vmul.f32 %v1661, 1.442695
  %v1663 = vpow.pop %v1662
  %v1664 = vadd.f32 %v1663, 1.0
  %v1665 = vrcp.pop %v1664
  %v1666 = vmul.f32 1.0, %v1665
  %1667 = vrot.lane.b32.xlu0 %v1586, 32
  %v1668 = vpop.permute.xlu0 %1667
  %v1670 = vmul.f32 %v1666, %v1668
  %1672 = vrot.lane.b32.xlu0 %v1670, 96
  %v1673 = vpop.permute.xlu0 %1672
  %v1674 = vsel %vm142, %v1673, 0
  %1676 = vmatprep.subr.mxu0 0.0
  %1677 = vmatpush1.msra.mxu0 %v70
  %1678 = vmatprep.subr.mxu0 0.0
  %1679 = vmatpush1.msra.mxu0 %v71
  %1680 = vmatprep.subr.mxu0 0.0
  %1681 = vmatpush1.msra.mxu0 %v72
  %1682 = vmatprep.subr.mxu0 0.0
  %1683 = vmatpush1.msra.mxu0 %v73
  %1684 = vmatprep.subr.mxu0 0.0
  %1685 = vmatpush1.msra.mxu0 0.0
  %1686 = vmatprep.subr.mxu0 0.0
  %1687 = vmatpush1.msra.mxu0 0.0
  %1688 = vmatprep.subr.mxu0 0.0
  %1689 = vmatpush1.msra.mxu0 0.0
  %1690 = vmatprep.subr.mxu0 0.0
  %1691 = vmatpush1.msra.mxu0 0.0
  %1692 = vmatprep.subr.mxu0 0.0
  %1693 = vmatpush1.msra.mxu0 0.0
  %1694 = vmatprep.subr.mxu0 0.0
  %1695 = vmatpush1.msra.mxu0 0.0
  %1696 = vmatprep.subr.mxu0 0.0
  %1697 = vmatpush1.msra.mxu0 0.0
  %1698 = vmatprep.subr.mxu0 0.0
  %1699 = vmatpush1.msra.mxu0 0.0
  %1700 = vmatprep.subr.mxu0 0.0
  %1701 = vmatpush1.msra.mxu0 0.0
  %1702 = vmatprep.subr.mxu0 0.0
  %1703 = vmatpush1.msra.mxu0 0.0
  %1704 = vmatprep.subr.mxu0 0.0
  %1705 = vmatpush1.msra.mxu0 0.0
  %1706 = vmatprep.subr.mxu0 0.0
  %1707 = vmatpush1.msra.mxu0 0.0
  %1708 = vmatprep.subr.mxu0 0.0
  %1709 = vmatpush1.msra.mxu0 0.0
  %1710 = vmatprep.subr.mxu0 0.0
  %1711 = vmatpush1.msra.mxu0 0.0
  %1712 = vmatprep.subr.mxu0 0.0
  %1713 = vmatpush1.msra.mxu0 0.0
  %1714 = vmatprep.subr.mxu0 0.0
  %1715 = vmatpush1.msra.mxu0 0.0
  %1716 = vmatprep.subr.mxu0 0.0
  %1717 = vmatpush1.msra.mxu0 0.0
  %1718 = vmatprep.subr.mxu0 0.0
  %1719 = vmatpush1.msra.mxu0 0.0
  %1720 = vmatprep.subr.mxu0 0.0
  %1721 = vmatpush1.msra.mxu0 0.0
  %1722 = vmatprep.subr.mxu0 0.0
  %1723 = vmatpush1.msra.mxu0 0.0
  %1724 = vmatprep.subr.mxu0 0.0
  %1725 = vmatpush1.msra.mxu0 0.0
  %1726 = vmatprep.subr.mxu0 0.0
  %1727 = vmatpush1.msra.mxu0 0.0
  %1728 = vmatprep.subr.mxu0 0.0
  %1729 = vmatpush1.msra.mxu0 0.0
  %1730 = vmatprep.subr.mxu0 0.0
  %1731 = vmatpush1.msra.mxu0 0.0
  %1732 = vmatprep.subr.mxu0 0.0
  %1733 = vmatpush1.msra.mxu0 0.0
  %1734 = vmatprep.subr.mxu0 0.0
  %1735 = vmatpush1.msra.mxu0 0.0
  %1736 = vmatprep.subr.mxu0 0.0
  %1737 = vmatpush1.msra.mxu0 0.0
  %1738 = vmatprep.subr.mxu0 0.0
  %1739 = vmatpush1.msra.mxu0 0.0
  %1740 = vmatprep.mubr.f32.mxu0 0.0
  %1741 = vmatmul.mubr.f32.gmra.mrb[0].mxu0 %v1674
  %v1742 = vpop.f32.mrb[0].mxu0
  %v1743 = vadd.f32 0.0, %v1742
  %v1744 = vpop.f32.mrb[0].mxu0
  %1745 = vdwg.mxu0
  %1747 = vrot.lane.b32.xlu0 %v1743, 64
  %v1748 = vpop.permute.xlu0 %1747
  %v1750 = vadd.f32 %v534, %v1748
  %v1751 = vtanh.pop %v1750
  %v1752 = vsub.f32 1.0, %v1666
  %v1753 = vmul.f32 %v1752, %v1586
  %1755 = vrot.lane.b32.xlu0 %v1751, 64
  %v1756 = vpop.permute.xlu0 %1755
  %v1758 = vmul.f32 %v1666, %v1756
  %v1759 = vadd.f32 %v1753, %v1758
  %v1760 = vmul.f32 %v303, %v1759
  %v1762 = vsel %vm142, %v1760, 0
  %1764 = vmatprep.subr.mxu0 0.0
  %1765 = vmatpush1.msra.mxu0 %v74
  %1766 = vmatprep.subr.mxu0 0.0
  %1767 = vmatpush1.msra.mxu0 %v75
  %1768 = vmatprep.subr.mxu0 0.0
  %1769 = vmatpush1.msra.mxu0 %v76
  %1770 = vmatprep.subr.mxu0 0.0
  %1771 = vmatpush1.msra.mxu0 %v77
  %1772 = vmatprep.subr.mxu0 0.0
  %1773 = vmatpush1.msra.mxu0 0.0
  %1774 = vmatprep.subr.mxu0 0.0
  %1775 = vmatpush1.msra.mxu0 0.0
  %1776 = vmatprep.subr.mxu0 0.0
  %1777 = vmatpush1.msra.mxu0 0.0
  %1778 = vmatprep.subr.mxu0 0.0
  %1779 = vmatpush1.msra.mxu0 0.0
  %1780 = vmatprep.subr.mxu0 0.0
  %1781 = vmatpush1.msra.mxu0 0.0
  %1782 = vmatprep.subr.mxu0 0.0
  %1783 = vmatpush1.msra.mxu0 0.0
  %1784 = vmatprep.subr.mxu0 0.0
  %1785 = vmatpush1.msra.mxu0 0.0
  %1786 = vmatprep.subr.mxu0 0.0
  %1787 = vmatpush1.msra.mxu0 0.0
  %1788 = vmatprep.subr.mxu0 0.0
  %1789 = vmatpush1.msra.mxu0 0.0
  %1790 = vmatprep.subr.mxu0 0.0
  %1791 = vmatpush1.msra.mxu0 0.0
  %1792 = vmatprep.subr.mxu0 0.0
  %1793 = vmatpush1.msra.mxu0 0.0
  %1794 = vmatprep.subr.mxu0 0.0
  %1795 = vmatpush1.msra.mxu0 0.0
  %1796 = vmatprep.subr.mxu0 0.0
  %1797 = vmatpush1.msra.mxu0 0.0
  %1798 = vmatprep.subr.mxu0 0.0
  %1799 = vmatpush1.msra.mxu0 0.0
  %1800 = vmatprep.subr.mxu0 0.0
  %1801 = vmatpush1.msra.mxu0 0.0
  %1802 = vmatprep.subr.mxu0 0.0
  %1803 = vmatpush1.msra.mxu0 0.0
  %1804 = vmatprep.subr.mxu0 0.0
  %1805 = vmatpush1.msra.mxu0 0.0
  %1806 = vmatprep.subr.mxu0 0.0
  %1807 = vmatpush1.msra.mxu0 0.0
  %1808 = vmatprep.subr.mxu0 0.0
  %1809 = vmatpush1.msra.mxu0 0.0
  %1810 = vmatprep.subr.mxu0 0.0
  %1811 = vmatpush1.msra.mxu0 0.0
  %1812 = vmatprep.subr.mxu0 0.0
  %1813 = vmatpush1.msra.mxu0 0.0
  %1814 = vmatprep.subr.mxu0 0.0
  %1815 = vmatpush1.msra.mxu0 0.0
  %1816 = vmatprep.subr.mxu0 0.0
  %1817 = vmatpush1.msra.mxu0 0.0
  %1818 = vmatprep.subr.mxu0 0.0
  %1819 = vmatpush1.msra.mxu0 0.0
  %1820 = vmatprep.subr.mxu0 0.0
  %1821 = vmatpush1.msra.mxu0 0.0
  %1822 = vmatprep.subr.mxu0 0.0
  %1823 = vmatpush1.msra.mxu0 0.0
  %1824 = vmatprep.subr.mxu0 0.0
  %1825 = vmatpush1.msra.mxu0 0.0
  %1826 = vmatprep.subr.mxu0 0.0
  %1827 = vmatpush1.msra.mxu0 0.0
  %1828 = vmatprep.mubr.f32.mxu0 0.0
  %1829 = vmatmul.mubr.f32.gmra.mrb[0].mxu0 %v1762
  %v1830 = vpop.f32.mrb[0].mxu0
  %v1831 = vadd.f32 0.0, %v1830
  %v1832 = vpop.f32.mrb[0].mxu0
  %1833 = vdwg.mxu0
  %v1834 = vadd.f32 %v539, %v1831
  %v1835 = vxor.u32 %v1834, 2147483648
  %v1836 = vmul.f32 %v1835, 1.442695
  %v1837 = vpow.pop %v1836
  %v1838 = vadd.f32 %v1837, 1.0
  %v1839 = vrcp.pop %v1838
  %v1840 = vmul.f32 1.0, %v1839
  %1841 = vrot.lane.b32.xlu0 %v1760, 32
  %v1842 = vpop.permute.xlu0 %1841
  %v1844 = vmul.f32 %v1840, %v1842
  %1846 = vrot.lane.b32.xlu0 %v1844, 96
  %v1847 = vpop.permute.xlu0 %1846
  %v1848 = vsel %vm142, %v1847, 0
  %1850 = vmatprep.subr.mxu0 0.0
  %1851 = vmatpush1.msra.mxu0 %v70
  %1852 = vmatprep.subr.mxu0 0.0
  %1853 = vmatpush1.msra.mxu0 %v71
  %1854 = vmatprep.subr.mxu0 0.0
  %1855 = vmatpush1.msra.mxu0 %v72
  %1856 = vmatprep.subr.mxu0 0.0
  %1857 = vmatpush1.msra.mxu0 %v73
  %1858 = vmatprep.subr.mxu0 0.0
  %1859 = vmatpush1.msra.mxu0 0.0
  %1860 = vmatprep.subr.mxu0 0.0
  %1861 = vmatpush1.msra.mxu0 0.0
  %1862 = vmatprep.subr.mxu0 0.0
  %1863 = vmatpush1.msra.mxu0 0.0
  %1864 = vmatprep.subr.mxu0 0.0
  %1865 = vmatpush1.msra.mxu0 0.0
  %1866 = vmatprep.subr.mxu0 0.0
  %1867 = vmatpush1.msra.mxu0 0.0
  %1868 = vmatprep.subr.mxu0 0.0
  %1869 = vmatpush1.msra.mxu0 0.0
  %1870 = vmatprep.subr.mxu0 0.0
  %1871 = vmatpush1.msra.mxu0 0.0
  %1872 = vmatprep.subr.mxu0 0.0
  %1873 = vmatpush1.msra.mxu0 0.0
  %1874 = vmatprep.subr.mxu0 0.0
  %1875 = vmatpush1.msra.mxu0 0.0
  %1876 = vmatprep.subr.mxu0 0.0
  %1877 = vmatpush1.msra.mxu0 0.0
  %1878 = vmatprep.subr.mxu0 0.0
  %1879 = vmatpush1.msra.mxu0 0.0
  %1880 = vmatprep.subr.mxu0 0.0
  %1881 = vmatpush1.msra.mxu0 0.0
  %1882 = vmatprep.subr.mxu0 0.0
  %1883 = vmatpush1.msra.mxu0 0.0
  %1884 = vmatprep.subr.mxu0 0.0
  %1885 = vmatpush1.msra.mxu0 0.0
  %1886 = vmatprep.subr.mxu0 0.0
  %1887 = vmatpush1.msra.mxu0 0.0
  %1888 = vmatprep.subr.mxu0 0.0
  %1889 = vmatpush1.msra.mxu0 0.0
  %1890 = vmatprep.subr.mxu0 0.0
  %1891 = vmatpush1.msra.mxu0 0.0
  %1892 = vmatprep.subr.mxu0 0.0
  %1893 = vmatpush1.msra.mxu0 0.0
  %1894 = vmatprep.subr.mxu0 0.0
  %1895 = vmatpush1.msra.mxu0 0.0
  %1896 = vmatprep.subr.mxu0 0.0
  %1897 = vmatpush1.msra.mxu0 0.0
  %1898 = vmatprep.subr.mxu0 0.0
  %1899 = vmatpush1.msra.mxu0 0.0
  %1900 = vmatprep.subr.mxu0 0.0
  %1901 = vmatpush1.msra.mxu0 0.0
  %1902 = vmatprep.subr.mxu0 0.0
  %1903 = vmatpush1.msra.mxu0 0.0
  %1904 = vmatprep.subr.mxu0 0.0
  %1905 = vmatpush1.msra.mxu0 0.0
  %1906 = vmatprep.subr.mxu0 0.0
  %1907 = vmatpush1.msra.mxu0 0.0
  %1908 = vmatprep.subr.mxu0 0.0
  %1909 = vmatpush1.msra.mxu0 0.0
  %1910 = vmatprep.subr.mxu0 0.0
  %1911 = vmatpush1.msra.mxu0 0.0
  %1912 = vmatprep.subr.mxu0 0.0
  %1913 = vmatpush1.msra.mxu0 0.0
  %1914 = vmatprep.mubr.f32.mxu0 0.0
  %1915 = vmatmul.mubr.f32.gmra.mrb[0].mxu0 %v1848
  %v1916 = vpop.f32.mrb[0].mxu0
  %v1917 = vadd.f32 0.0, %v1916
  %v1918 = vpop.f32.mrb[0].mxu0
  %1919 = vdwg.mxu0
  %1921 = vrot.lane.b32.xlu0 %v1917, 64
  %v1922 = vpop.permute.xlu0 %1921
  %v1924 = vadd.f32 %v539, %v1922
  %v1925 = vtanh.pop %v1924
  %v1926 = vsub.f32 1.0, %v1840
  %v1927 = vmul.f32 %v1926, %v1760
  %1929 = vrot.lane.b32.xlu0 %v1925, 64
  %v1930 = vpop.permute.xlu0 %1929
  %v1932 = vmul.f32 %v1840, %v1930
  %v1933 = vadd.f32 %v1927, %v1932
  %1935 = vrot.lane.b32.xlu0 %v889, 32
  %v1936 = vpop.permute.xlu0 %1935
  %1939 = vrot.lane.b32.xlu0 %v1063, 64
  %v1940 = vpop.permute.xlu0 %1939
  %1943 = vrot.lane.b32.xlu0 %v1237, 96
  %v1944 = vpop.permute.xlu0 %1943
  %1947 = vrot.lane.b32.xlu0 %v1585, 32
  %v1948 = vpop.permute.xlu0 %1947
  %1951 = vrot.lane.b32.xlu0 %v1759, 64
  %v1952 = vpop.permute.xlu0 %1951
  %1955 = vrot.lane.b32.xlu0 %v1933, 96
  %v1956 = vpop.permute.xlu0 %1955
  %v1958 = vsel %vm142, %v715, %v1936
  %v1959 = vsel %vm412, %v1958, %v1940
  %vm1960 = vcmask 785408
  %v1961 = vsel %vm1960, %v1959, %v1944
  %v1962 = vsel %vm142, %v1411, %v1948
  %v1963 = vsel %vm412, %v1962, %v1952
  %v1964 = vsel %vm1960, %v1963, %v1956
  %1965 = vst [vmem:[%s3] sm:$0xff] %v1961
  %1966 = vst [vmem:[%s3 + $0x8] sm:$0xff] %v1964
  // Predicated region
  $region14: #{grud_forward.1} parent=0 // pred_check
    _
  $region15: #{grud_forward.1} parent=0 // pred_check_branch
    %1968 = sbr.rel (0) target = $region17
  $region16: #{grud_forward.1} parent=0 // pred_region
    _
  $region17: #{grud_forward.1} parent=0 // pred_fallthru
    _
  // Predicated region
  $region18: #{grud_forward.1} parent=0 // pred_check
    _
  $region19: #{grud_forward.1} parent=0 // pred_check_branch
    %1970 = sbr.rel (0) target = $region21
  $region20: #{grud_forward.1} parent=0 // pred_region
    _
  $region21: #{grud_forward.1} parent=0 // pred_fallthru
    _

</llo_original>
